<compile_context>
chip_gen: v5e
topology: v5e:2x2
jax: 0.10.0
libtpu: 0.0.40
codegen_flags: <defaults>
</compile_context>

<pallas_src>
import functools
import math

import jax
import jax.numpy as jnp
from jax import lax
from jax.experimental import pallas as pl
from jax.experimental.pallas import tpu as pltpu


# ------------------------- hardware-aware sizing helpers ----------------------

def _query_vmem_capacity():
    try:
        return int(pltpu.get_tpu_info().vmem_capacity_bytes)
    except Exception:
        return 64 * 1024 * 1024          # conservative fallback (v7x per-core VMEM)


_VMEM_CAP = _query_vmem_capacity()
_BIG_VMEM = _VMEM_CAP >= 96 * 1024 * 1024       # v5e / v6e (128 MiB) vs v7x (64 MiB)


def _nbytes(shape, dtype):
    return int(math.prod(shape)) * jnp.dtype(dtype).itemsize


def _cparams(grid_rank, est_bytes):
    # Leave ~15% of physical VMEM as headroom for compiler-internal scratch.
    cap = int(_VMEM_CAP * 0.85)
    limit = min(cap, max(int(est_bytes * 1.25), min(16 * 1024 * 1024, cap)))
    return pltpu.CompilerParams(
        dimension_semantics=("parallel",) * grid_rank,
        vmem_limit_bytes=limit)


def _row_tile(n):
    # Larger tiles on v5e/v6e (128 MiB VMEM), capped at 256 on v7x (64 MiB).
    cands = (512, 256, 128, 64, 32, 16, 8) if _BIG_VMEM else (256, 128, 64, 32, 16, 8)
    for t in cands:
        if n % t == 0:
            return t
    return n


def _vocab_tile(v):
    cands = (4096, 2048, 1024, 512, 256, 128) if _BIG_VMEM else (2048, 1024, 512, 256, 128)
    for t in cands:
        if v % t == 0:
            return t
    return v


def _const_spec(shape):
    nd = len(shape)
    return pl.BlockSpec(shape, lambda *_, _nd=nd: (0,) * _nd)


# ----------------------------- math helpers -----------------------------------

def _layernorm(x, scale, shift, eps=1e-5):
    mean = jnp.mean(x, axis=-1, keepdims=True)
    var = jnp.mean((x - mean) ** 2, axis=-1, keepdims=True)      # unbiased=False
    return scale * ((x - mean) * lax.rsqrt(var + eps)) + shift


def _gelu(x):
    # tanh-approximation GELU (as in the reference GELU module)
    c = math.sqrt(2.0 / math.pi)
    return 0.5 * x * (1.0 + jnp.tanh(c * (x + 0.044715 * x * x * x)))


def _mxu_dot(h_f32, w, b=None):
    """Matmul with stored-dtype weights (f32 or bf16) and f32 accumulation."""
    lhs = h_f32 if w.dtype == jnp.float32 else h_f32.astype(w.dtype)
    out = jnp.dot(lhs, w, preferred_element_type=jnp.float32)
    if b is not None:
        out = out + b.astype(jnp.float32)
    return out


# ----------------------------- kernels -----------------------------------------

def qkv_proj_kernel(x_ref, ln1s_ref, ln1b_ref, wqkv_ref, bqkv_ref, qkv_ref):
    """LN1 + fused QKV projection.  1/sqrt(head_dim) is pre-folded into the q
    columns of w_qkv / b_qkv at weight-prep time (no in-kernel column scale)."""
    x = x_ref[...].astype(jnp.float32)                               # (TT, D)
    h = _layernorm(x, ln1s_ref[...].astype(jnp.float32),
                   ln1b_ref[...].astype(jnp.float32))
    qkv_ref[...] = _mxu_dot(h, wqkv_ref[...], bqkv_ref[...]).astype(qkv_ref.dtype)


def attention_kernel(x_ref, qkvq_ref, qkvkv_ref, wo_ref, bo_ref, o_ref, *, num_heads):
    """Causal MHA for one query tile, with the out-projection (wo, bo) and the
    attention residual fused in.  Heads are split by lane-slicing the fused QKV
    block in-kernel (no (B, H, T, hd) HBM intermediate, no XLA head transposes).
    Per-head 2-D dots (statically unrolled) avoid any in-kernel major-dim
    transpose; MXU work is identical to the head-batched form."""
    x = x_ref[...].astype(jnp.float32)                # (TQ, D)  residual stream
    qkv_q = qkvq_ref[...]                             # (TQ, 3D) this query tile
    kv = qkvkv_ref[...]                               # (T,  3D) full sequence (this batch elem)
    tq, d = x.shape
    t = kv.shape[0]
    hd = d // num_heads

    qi = pl.program_id(1)
    row = qi * tq + lax.broadcasted_iota(jnp.int32, (tq, t), 0)
    col = lax.broadcasted_iota(jnp.int32, (tq, t), 1)
    causal = col > row                                # True -> masked out

    acc = jnp.zeros((tq, d), jnp.float32)
    for h in range(num_heads):
        q_h = qkv_q[:, h * hd:(h + 1) * hd]                       # (TQ, hd), pre-scaled
        k_h = kv[:, d + h * hd:d + (h + 1) * hd]                  # (T,  hd)
        v_h = kv[:, 2 * d + h * hd:2 * d + (h + 1) * hd]          # (T,  hd)
        s = lax.dot_general(q_h, k_h, (((1,), (1,)), ((), ())),
                            preferred_element_type=jnp.float32)   # (TQ, T)
        s = jnp.where(causal, jnp.float32(-1e30), s)
        s = s - jnp.max(s, axis=-1, keepdims=True)
        p = jnp.exp(s)
        p = p / jnp.sum(p, axis=-1, keepdims=True)                # exact divide
        ctx = jnp.dot(p.astype(v_h.dtype), v_h,
                      preferred_element_type=jnp.float32)         # (TQ, hd)
        w_h = wo_ref[h * hd:(h + 1) * hd, :]                      # (hd, D)
        acc = acc + jnp.dot(ctx.astype(w_h.dtype), w_h,
                            preferred_element_type=jnp.float32)   # (TQ, D)

    o_ref[...] = (x + acc + bo_ref[...].astype(jnp.float32)).astype(o_ref.dtype)


def mlp_kernel(x_ref, ln2s_ref, ln2b_ref, w1_ref, b1_ref, w2_ref, b2_ref, o_ref):
    """Pre-LN GELU MLP + residual."""
    x = x_ref[...].astype(jnp.float32)                               # (TT, D)
    h = _layernorm(x, ln2s_ref[...].astype(jnp.float32),
                   ln2b_ref[...].astype(jnp.float32))
    h = _gelu(_mxu_dot(h, w1_ref[...], b1_ref[...]))                 # (TT, 4D)
    o_ref[...] = (x + _mxu_dot(h, w2_ref[...], b2_ref[...])).astype(o_ref.dtype)


def final_head_kernel(x_ref, lns_ref, lnb_ref, wout_ref, bout_ref, o_ref):
    """Final LN + one (row tile, vocab tile) of the LM head."""
    x = x_ref[...].astype(jnp.float32)                               # (TM, D)
    h = _layernorm(x, lns_ref[...].astype(jnp.float32),
                   lnb_ref[...].astype(jnp.float32))
    o_ref[...] = _mxu_dot(h, wout_ref[...], bout_ref[...]).astype(o_ref.dtype)


# ----------------------------- pallas_call wrappers -----------------------------

def transformer_block(x, blk, num_heads, batch, seq):
    """x: (B*T, D) residual stream. Returns (B*T, D)."""
    M, D = x.shape
    act_dt = x.dtype
    TT = _row_tile(M)                 # row tile for the projection / MLP kernels
    TQ = _row_tile(seq)               # query tile for attention
    n_q = seq // TQ

    # ---- 1) LN1 + fused QKV projection ----
    qkv_params = [blk["ln1_scale"], blk["ln1_shift"], blk["w_qkv"], blk["b_qkv"]]
    est1 = (2 * (_nbytes((TT, D), act_dt) + _nbytes((TT, 3 * D), act_dt))
            + 2 * sum(_nbytes(p.shape, p.dtype) for p in qkv_params)
            + _nbytes((TT, 3 * D), jnp.float32) + _nbytes((TT, D), jnp.float32))
    qkv = pl.pallas_call(
        qkv_proj_kernel,
        out_shape=jax.ShapeDtypeStruct((M, 3 * D), act_dt),
        grid=(M // TT,),
        in_specs=[pl.BlockSpec((TT, D), lambda i: (i, 0))]
                 + [_const_spec(p.shape) for p in qkv_params],
        out_specs=pl.BlockSpec((TT, 3 * D), lambda i: (i, 0)),
        compiler_params=_cparams(1, est1),
    )(x, *qkv_params)

    # ---- 2) causal attention + fused out-projection + residual ----
    # The full (T, 3D) KV block has a constant index across the inner query-tile
    # axis, so Pallas keeps it resident (fetched once per batch element).
    est2 = (2 * (2 * _nbytes((TQ, D), act_dt) + _nbytes((TQ, 3 * D), act_dt)
                 + _nbytes((seq, 3 * D), act_dt))
            + 2 * (_nbytes(blk["wo"].shape, blk["wo"].dtype)
                   + _nbytes(blk["bo"].shape, blk["bo"].dtype))
            + 3 * _nbytes((TQ, seq), jnp.float32)
            + 2 * _nbytes((TQ, D), jnp.float32))
    x1 = pl.pallas_call(
        functools.partial(attention_kernel, num_heads=num_heads),
        out_shape=jax.ShapeDtypeStruct((M, D), act_dt),
        grid=(batch, n_q),
        in_specs=[pl.BlockSpec((TQ, D), lambda b, i: (b * n_q + i, 0)),
                  pl.BlockSpec((TQ, 3 * D), lambda b, i: (b * n_q + i, 0)),
                  pl.BlockSpec((seq, 3 * D), lambda b, i: (b, 0)),
                  _const_spec(blk["wo"].shape),
                  _const_spec(blk["bo"].shape)],
        out_specs=pl.BlockSpec((TQ, D), lambda b, i: (b * n_q + i, 0)),
        compiler_params=_cparams(2, est2),
    )(x, qkv, qkv, blk["wo"], blk["bo"])

    # ---- 3) LN2 + GELU MLP + residual ----
    # TODO(synk): for very large D at f32 on v7x, tile the 4D hidden dim with a
    #             reduction grid axis; the bf16 default keeps this layout valid.
    mlp_params = [blk["ln2_scale"], blk["ln2_shift"],
                  blk["w1"], blk["b1"], blk["w2"], blk["b2"]]
    est3 = (2 * 2 * _nbytes((TT, D), act_dt)
            + 2 * sum(_nbytes(p.shape, p.dtype) for p in mlp_params)
            + 2 * _nbytes((TT, 4 * D), jnp.float32) + _nbytes((TT, D), jnp.float32))
    return pl.pallas_call(
        mlp_kernel,
        out_shape=jax.ShapeDtypeStruct((M, D), act_dt),
        grid=(M // TT,),
        in_specs=[pl.BlockSpec((TT, D), lambda i: (i, 0))]
                 + [_const_spec(p.shape) for p in mlp_params],
        out_specs=pl.BlockSpec((TT, D), lambda i: (i, 0)),
        compiler_params=_cparams(1, est3),
    )(x1, *mlp_params)


def final_head(x, ln_scale, ln_shift, w_out, b_out):
    """x: (B*T, D). Returns (B*T, V) f32 logits."""
    M, D = x.shape
    V = w_out.shape[1]
    TM = _row_tile(M)
    TV = _vocab_tile(V)
    est = (2 * (_nbytes((TM, D), x.dtype) + _nbytes((TM, TV), jnp.float32)
                + _nbytes((D, TV), w_out.dtype) + _nbytes((1, TV), b_out.dtype))
           + 2 * (_nbytes(ln_scale.shape, ln_scale.dtype)
                  + _nbytes(ln_shift.shape, ln_shift.dtype))
           + _nbytes((TM, TV), jnp.float32) + _nbytes((TM, D), jnp.float32))
    # Vocab OUTER / rows INNER: the (D, TV) w_out tile index is constant across the
    # inner row axis, so the (D, V) weight streams from HBM exactly once per forward.
    return pl.pallas_call(
        final_head_kernel,
        out_shape=jax.ShapeDtypeStruct((M, V), jnp.float32),
        grid=(V // TV, M // TM),
        in_specs=[pl.BlockSpec((TM, D), lambda j, i: (i, 0)),
                  _const_spec(ln_scale.shape),
                  _const_spec(ln_shift.shape),
                  pl.BlockSpec((D, TV), lambda j, i: (0, j)),
                  pl.BlockSpec((1, TV), lambda j, i: (0, j))],
        out_specs=pl.BlockSpec((TM, TV), lambda j, i: (i, j)),
        compiler_params=_cparams(2, est),
    )(x, ln_scale, ln_shift, w_out, b_out)


# ----------------------------- model --------------------------------------------

def init_params(key, cfg, param_dtype=jnp.bfloat16):
    D = cfg["token_emb_dim"]
    V = cfg["vocab_size"]
    C = cfg["context_length"]
    L = cfg["num_layers"]
    keys = jax.random.split(key, 3 + L)

    def w(k, shape):
        return (0.02 * jax.random.normal(k, shape, jnp.float32)).astype(param_dtype)

    p = {
        "tok_emb": w(keys[0], (V, D)),
        "pos_emb": w(keys[1], (C, D)),
        "final_ln_scale": jnp.ones((1, D), jnp.float32),
        "final_ln_shift": jnp.zeros((1, D), jnp.float32),
        "w_out": w(keys[2], (D, V)),
        "b_out": jnp.zeros((1, V), param_dtype),
        "blocks": [],
    }
    for i in range(L):
        k = jax.random.split(keys[3 + i], 4)
        p["blocks"].append({
            "ln1_scale": jnp.ones((1, D), jnp.float32),
            "ln1_shift": jnp.zeros((1, D), jnp.float32),
            "w_qkv": w(k[0], (D, 3 * D)),          # fused QKV weight
            "b_qkv": jnp.zeros((1, 3 * D), param_dtype),
            "wo": w(k[1], (D, D)),
            "bo": jnp.zeros((1, D), param_dtype),
            "ln2_scale": jnp.ones((1, D), jnp.float32),
            "ln2_shift": jnp.zeros((1, D), jnp.float32),
            "w1": w(k[2], (D, 4 * D)),
            "b1": jnp.zeros((1, 4 * D), param_dtype),
            "w2": w(k[3], (4 * D, D)),
            "b2": jnp.zeros((1, D), param_dtype),
        })
    return p


def prepare_params(params, cfg):
    """Kernel-side weight prep (done once at load time, zero runtime cost):
    fold 1/sqrt(head_dim) into the q columns of w_qkv / b_qkv."""
    D = cfg["token_emb_dim"]
    hd = D // cfg["num_heads"]
    col_scale = jnp.concatenate([
        jnp.full((D,), 1.0 / math.sqrt(hd), jnp.float32),
        jnp.ones((2 * D,), jnp.float32)])
    out = dict(params)
    out["blocks"] = []
    for blk in params["blocks"]:
        b = dict(blk)
        b["w_qkv"] = (blk["w_qkv"].astype(jnp.float32) * col_scale).astype(blk["w_qkv"].dtype)
        b["b_qkv"] = (blk["b_qkv"].astype(jnp.float32) * col_scale).astype(blk["b_qkv"].dtype)
        out["blocks"].append(b)
    return out


def gpt_forward(tokens, params, cfg):
    """tokens: (B, T) int32 -> logits (B, T, V) f32.  Expects prepare_params() output."""
    B, T = tokens.shape
    D = cfg["token_emb_dim"]
    H = cfg["num_heads"]
    act_dt = params["blocks"][0]["w_qkv"].dtype       # bf16 by default

    # Embedding lookups are plain-JAX glue (gather has no clean rectangular BlockSpec).
    x = params["tok_emb"][tokens] + params["pos_emb"][:T][None, :, :]
    x = x.astype(act_dt).reshape(B * T, D)            # dropout = identity
    # TODO(synk): cross-layer weight prefetch (P10 futures) not implemented.
    for blk in params["blocks"]:
        x = transformer_block(x, blk, H, B, T)
    logits = final_head(x, params["final_ln_scale"], params["final_ln_shift"],
                        params["w_out"], params["b_out"])
    return logits.reshape(B, T, -1)


# ----------------------------- pure-JAX reference --------------------------------

def reference_forward(tokens, params, cfg):
    """PyTorch-semantics reference: f32 math, raw (un-folded) weights."""
    H = cfg["num_heads"]
    T = tokens.shape[1]
    f32 = jnp.float32
    x = params["tok_emb"].astype(f32)[tokens] + params["pos_emb"].astype(f32)[:T][None]
    for blk in params["blocks"]:
        D = x.shape[-1]
        hd = D // H
        h = _layernorm(x, blk["ln1_scale"].astype(f32), blk["ln1_shift"].astype(f32))
        qkv = h @ blk["w_qkv"].astype(f32) + blk["b_qkv"].astype(f32)
        q, k, v = jnp.split(qkv, 3, axis=-1)
        B, Tt, _ = q.shape
        q = q.reshape(B, Tt, H, hd).transpose(0, 2, 1, 3)
        k = k.reshape(B, Tt, H, hd).transpose(0, 2, 1, 3)
        v = v.reshape(B, Tt, H, hd).transpose(0, 2, 1, 3)
        s = jnp.einsum("bhqd,bhkd->bhqk", q, k) / jnp.sqrt(jnp.float32(hd))
        mask = jnp.triu(jnp.ones((Tt, Tt), bool), k=1)
        s = jnp.where(mask, -jnp.inf, s)
        p = jax.nn.softmax(s, axis=-1)
        ctx = jnp.einsum("bhqk,bhkd->bhqd", p, v).transpose(0, 2, 1, 3).reshape(B, Tt, D)
        x = x + (ctx @ blk["wo"].astype(f32) + blk["bo"].astype(f32))
        h = _layernorm(x, blk["ln2_scale"].astype(f32), blk["ln2_shift"].astype(f32))
        h = _gelu(h @ blk["w1"].astype(f32) + blk["b1"].astype(f32))
        x = x + (h @ blk["w2"].astype(f32) + blk["b2"].astype(f32))
    x = _layernorm(x, params["final_ln_scale"].astype(f32), params["final_ln_shift"].astype(f32))
    return x @ params["w_out"].astype(f32) + params["b_out"].astype(f32)


# ----------------------------- main -----------------------------------------------

if __name__ == "__main__":
    cfg = {
        "vocab_size": 128,
        "context_length": 16,
        "token_emb_dim": 32,
        "num_heads": 4,
        "num_layers": 2,
        "droprate": 0.0,
        "qkv_bias": True,
    }
    B, T = 2, 8

    key = jax.random.PRNGKey(0)
    pkey, tkey = jax.random.split(key)
    params = init_params(pkey, cfg)                 # bf16 weights/activations by default
    kernel_params = prepare_params(params, cfg)     # fold 1/sqrt(hd) into q columns
    tokens = jax.random.randint(tkey, (B, T), 0, cfg["vocab_size"], dtype=jnp.int32)

    fwd = jax.jit(functools.partial(gpt_forward, cfg=cfg))
    logits = jax.block_until_ready(fwd(tokens, kernel_params))

    assert logits.shape == (B, T, cfg["vocab_size"]), logits.shape
    assert bool(jnp.all(jnp.isfinite(logits)))

    ref = reference_forward(tokens, params, cfg)    # f32 reference with raw weights
    assert bool(jnp.allclose(logits, ref, atol=5e-2, rtol=5e-2)), (
        float(jnp.max(jnp.abs(logits - ref))))

    print("KERNEL_OK")
</pallas_src>

<mosaic_0001>
module attributes {stable_mosaic.version = 11 : i64} {
  func.func @final_head_kernel(%arg0: i32, %arg1: i32, %arg2: memref<16x32xbf16, #tpu.memory_space<vmem>>, %arg3: memref<1x32xf32, #tpu.memory_space<vmem>>, %arg4: memref<1x32xf32, #tpu.memory_space<vmem>>, %arg5: memref<32x128xbf16, #tpu.memory_space<vmem>>, %arg6: memref<1x128xbf16, #tpu.memory_space<vmem>>, %arg7: memref<16x128xf32, #tpu.memory_space<vmem>>) attributes {dimension_semantics = [#tpu.dimension_semantics<parallel>, #tpu.dimension_semantics<parallel>], iteration_bounds = array<i64: 1, 1>, scalar_prefetch = 0 : i64, scratch_operands = 0 : i64, tpu.core_type = #tpu.core_type<tc>, window_params = [{transform_indices = @transform_0, window_bounds = array<i64: 16, 32>}, {pipeline_mode = #tpu.pipeline_mode<synchronous>, transform_indices = @transform_1, window_bounds = array<i64: 1, 32>}, {pipeline_mode = #tpu.pipeline_mode<synchronous>, transform_indices = @transform_2, window_bounds = array<i64: 1, 32>}, {transform_indices = @transform_3, window_bounds = array<i64: 32, 128>}, {transform_indices = @transform_4, window_bounds = array<i64: 1, 128>}, {transform_indices = @transform_5, window_bounds = array<i64: 16, 128>}]} {
    %c0 = arith.constant 0 : index
    %c0_0 = arith.constant 0 : index
    %0 = vector.load %arg2[%c0, %c0_0] : memref<16x32xbf16, #tpu.memory_space<vmem>>, vector<16x32xbf16>
    %1 = arith.extf %0 : vector<16x32xbf16> to vector<16x32xf32>
    %c0_1 = arith.constant 0 : index
    %c0_2 = arith.constant 0 : index
    %2 = vector.load %arg3[%c0_1, %c0_2] : memref<1x32xf32, #tpu.memory_space<vmem>>, vector<1x32xf32>
    %c0_3 = arith.constant 0 : index
    %c0_4 = arith.constant 0 : index
    %3 = vector.load %arg4[%c0_3, %c0_4] : memref<1x32xf32, #tpu.memory_space<vmem>>, vector<1x32xf32>
    %cst = arith.constant dense<0.000000e+00> : vector<16xf32>
    %4 = vector.multi_reduction <add>, %1, %cst [1] : vector<16x32xf32> to vector<16xf32>
    %5 = vector.shape_cast %4 : vector<16xf32> to vector<16x1xf32>
    %cst_5 = arith.constant 3.200000e+01 : f32
    %6 = vector.broadcast %cst_5 : f32 to vector<16x1xf32>
    %7 = arith.divf %5, %6 : vector<16x1xf32>
    %8 = vector.broadcast %7 : vector<16x1xf32> to vector<16x32xf32>
    %9 = arith.subf %1, %8 : vector<16x32xf32>
    %10 = arith.mulf %9, %9 : vector<16x32xf32>
    %cst_6 = arith.constant dense<0.000000e+00> : vector<16xf32>
    %11 = vector.multi_reduction <add>, %10, %cst_6 [1] : vector<16x32xf32> to vector<16xf32>
    %12 = vector.shape_cast %11 : vector<16xf32> to vector<16x1xf32>
    %cst_7 = arith.constant 3.200000e+01 : f32
    %13 = vector.broadcast %cst_7 : f32 to vector<16x1xf32>
    %14 = arith.divf %12, %13 : vector<16x1xf32>
    %15 = vector.broadcast %7 : vector<16x1xf32> to vector<16x32xf32>
    %16 = arith.subf %1, %15 : vector<16x32xf32>
    %cst_8 = arith.constant 9.99999974E-6 : f32
    %17 = vector.broadcast %cst_8 : f32 to vector<16x1xf32>
    %18 = arith.addf %14, %17 : vector<16x1xf32>
    %19 = math.rsqrt %18 : vector<16x1xf32>
    %20 = vector.broadcast %19 : vector<16x1xf32> to vector<16x32xf32>
    %21 = arith.mulf %16, %20 : vector<16x32xf32>
    %22 = vector.broadcast %2 : vector<1x32xf32> to vector<16x32xf32>
    %23 = arith.mulf %22, %21 : vector<16x32xf32>
    %24 = vector.broadcast %3 : vector<1x32xf32> to vector<16x32xf32>
    %25 = arith.addf %23, %24 : vector<16x32xf32>
    %c0_9 = arith.constant 0 : index
    %c0_10 = arith.constant 0 : index
    %26 = vector.load %arg5[%c0_9, %c0_10] : memref<32x128xbf16, #tpu.memory_space<vmem>>, vector<32x128xbf16>
    %c0_11 = arith.constant 0 : index
    %c0_12 = arith.constant 0 : index
    %27 = vector.load %arg6[%c0_11, %c0_12] : memref<1x128xbf16, #tpu.memory_space<vmem>>, vector<1x128xbf16>
    %28 = arith.truncf %25 : vector<16x32xf32> to vector<16x32xbf16>
    %cst_13 = arith.constant dense<0.000000e+00> : vector<16x128xf32>
    %29 = tpu.matmul %28, %26, %cst_13 {dimension_numbers = #tpu.dot_dimension_numbers<[1], [0], [0], [1], [0, 0, 1, 1], [], []>} : vector<16x32xbf16>, vector<32x128xbf16>, vector<16x128xf32> -> vector<16x128xf32>
    %30 = arith.extf %27 : vector<1x128xbf16> to vector<1x128xf32>
    %31 = vector.broadcast %30 : vector<1x128xf32> to vector<16x128xf32>
    %32 = arith.addf %29, %31 : vector<16x128xf32>
    %c0_14 = arith.constant 0 : index
    %c0_15 = arith.constant 0 : index
    %33 = vector.load %arg7[%c0_14, %c0_15] : memref<16x128xf32, #tpu.memory_space<vmem>>, vector<16x128xf32>
    tpu.vector_store %arg7[%c0_14, %c0_15], %32 {strides = array<i32>} : memref<16x128xf32, #tpu.memory_space<vmem>>, vector<16x128xf32>,
    return
  }
  func.func @transform_0(%arg0: i32, %arg1: i32) -> (i32, i32) {
    %c0_i32 = arith.constant 0 : i32
    %c0_i32_0 = arith.constant 0 : i32
    return %arg1, %c0_i32 : i32, i32
  }
  func.func @transform_1(%arg0: i32, %arg1: i32) -> (i32, i32) {
    %c0_i32 = arith.constant 0 : i32
    %c0_i32_0 = arith.constant 0 : i32
    %c0_i32_1 = arith.constant 0 : i32
    return %c0_i32, %c0_i32_0 : i32, i32
  }
  func.func @transform_2(%arg0: i32, %arg1: i32) -> (i32, i32) {
    %c0_i32 = arith.constant 0 : i32
    %c0_i32_0 = arith.constant 0 : i32
    %c0_i32_1 = arith.constant 0 : i32
    return %c0_i32, %c0_i32_0 : i32, i32
  }
  func.func @transform_3(%arg0: i32, %arg1: i32) -> (i32, i32) {
    %c0_i32 = arith.constant 0 : i32
    %c0_i32_0 = arith.constant 0 : i32
    return %c0_i32, %arg0 : i32, i32
  }
  func.func @transform_4(%arg0: i32, %arg1: i32) -> (i32, i32) {
    %c0_i32 = arith.constant 0 : i32
    %c0_i32_0 = arith.constant 0 : i32
    return %c0_i32, %arg0 : i32, i32
  }
  func.func @transform_5(%arg0: i32, %arg1: i32) -> (i32, i32) {
    %c0_i32 = arith.constant 0 : i32
    return %arg1, %arg0 : i32, i32
  }
}

module attributes {stable_mosaic.version = 11 : i64} {
  func.func @qkv_proj_kernel(%arg0: i32, %arg1: memref<16x32xbf16, #tpu.memory_space<vmem>>, %arg2: memref<1x32xf32, #tpu.memory_space<vmem>>, %arg3: memref<1x32xf32, #tpu.memory_space<vmem>>, %arg4: memref<32x96xbf16, #tpu.memory_space<vmem>>, %arg5: memref<1x96xbf16, #tpu.memory_space<vmem>>, %arg6: memref<16x96xbf16, #tpu.memory_space<vmem>>) attributes {dimension_semantics = [#tpu.dimension_semantics<parallel>], iteration_bounds = array<i64: 1>, scalar_prefetch = 0 : i64, scratch_operands = 0 : i64, tpu.core_type = #tpu.core_type<tc>, window_params = [{transform_indices = @transform_0, window_bounds = array<i64: 16, 32>}, {pipeline_mode = #tpu.pipeline_mode<synchronous>, transform_indices = @transform_1, window_bounds = array<i64: 1, 32>}, {pipeline_mode = #tpu.pipeline_mode<synchronous>, transform_indices = @transform_2, window_bounds = array<i64: 1, 32>}, {pipeline_mode = #tpu.pipeline_mode<synchronous>, transform_indices = @transform_3, window_bounds = array<i64: 32, 96>}, {pipeline_mode = #tpu.pipeline_mode<synchronous>, transform_indices = @transform_4, window_bounds = array<i64: 1, 96>}, {transform_indices = @transform_5, window_bounds = array<i64: 16, 96>}]} {
    %c0 = arith.constant 0 : index
    %c0_0 = arith.constant 0 : index
    %0 = vector.load %arg1[%c0, %c0_0] : memref<16x32xbf16, #tpu.memory_space<vmem>>, vector<16x32xbf16>
    %1 = arith.extf %0 : vector<16x32xbf16> to vector<16x32xf32>
    %c0_1 = arith.constant 0 : index
    %c0_2 = arith.constant 0 : index
    %2 = vector.load %arg2[%c0_1, %c0_2] : memref<1x32xf32, #tpu.memory_space<vmem>>, vector<1x32xf32>
    %c0_3 = arith.constant 0 : index
    %c0_4 = arith.constant 0 : index
    %3 = vector.load %arg3[%c0_3, %c0_4] : memref<1x32xf32, #tpu.memory_space<vmem>>, vector<1x32xf32>
    %cst = arith.constant dense<0.000000e+00> : vector<16xf32>
    %4 = vector.multi_reduction <add>, %1, %cst [1] : vector<16x32xf32> to vector<16xf32>
    %5 = vector.shape_cast %4 : vector<16xf32> to vector<16x1xf32>
    %cst_5 = arith.constant 3.200000e+01 : f32
    %6 = vector.broadcast %cst_5 : f32 to vector<16x1xf32>
    %7 = arith.divf %5, %6 : vector<16x1xf32>
    %8 = vector.broadcast %7 : vector<16x1xf32> to vector<16x32xf32>
    %9 = arith.subf %1, %8 : vector<16x32xf32>
    %10 = arith.mulf %9, %9 : vector<16x32xf32>
    %cst_6 = arith.constant dense<0.000000e+00> : vector<16xf32>
    %11 = vector.multi_reduction <add>, %10, %cst_6 [1] : vector<16x32xf32> to vector<16xf32>
    %12 = vector.shape_cast %11 : vector<16xf32> to vector<16x1xf32>
    %cst_7 = arith.constant 3.200000e+01 : f32
    %13 = vector.broadcast %cst_7 : f32 to vector<16x1xf32>
    %14 = arith.divf %12, %13 : vector<16x1xf32>
    %15 = vector.broadcast %7 : vector<16x1xf32> to vector<16x32xf32>
    %16 = arith.subf %1, %15 : vector<16x32xf32>
    %cst_8 = arith.constant 9.99999974E-6 : f32
    %17 = vector.broadcast %cst_8 : f32 to vector<16x1xf32>
    %18 = arith.addf %14, %17 : vector<16x1xf32>
    %19 = math.rsqrt %18 : vector<16x1xf32>
    %20 = vector.broadcast %19 : vector<16x1xf32> to vector<16x32xf32>
    %21 = arith.mulf %16, %20 : vector<16x32xf32>
    %22 = vector.broadcast %2 : vector<1x32xf32> to vector<16x32xf32>
    %23 = arith.mulf %22, %21 : vector<16x32xf32>
    %24 = vector.broadcast %3 : vector<1x32xf32> to vector<16x32xf32>
    %25 = arith.addf %23, %24 : vector<16x32xf32>
    %c0_9 = arith.constant 0 : index
    %c0_10 = arith.constant 0 : index
    %26 = vector.load %arg4[%c0_9, %c0_10] : memref<32x96xbf16, #tpu.memory_space<vmem>>, vector<32x96xbf16>
    %c0_11 = arith.constant 0 : index
    %c0_12 = arith.constant 0 : index
    %27 = vector.load %arg5[%c0_11, %c0_12] : memref<1x96xbf16, #tpu.memory_space<vmem>>, vector<1x96xbf16>
    %28 = arith.truncf %25 : vector<16x32xf32> to vector<16x32xbf16>
    %cst_13 = arith.constant dense<0.000000e+00> : vector<16x96xf32>
    %29 = tpu.matmul %28, %26, %cst_13 {dimension_numbers = #tpu.dot_dimension_numbers<[1], [0], [0], [1], [0, 0, 1, 1], [], []>} : vector<16x32xbf16>, vector<32x96xbf16>, vector<16x96xf32> -> vector<16x96xf32>
    %30 = arith.extf %27 : vector<1x96xbf16> to vector<1x96xf32>
    %31 = vector.broadcast %30 : vector<1x96xf32> to vector<16x96xf32>
    %32 = arith.addf %29, %31 : vector<16x96xf32>
    %33 = arith.truncf %32 : vector<16x96xf32> to vector<16x96xbf16>
    %c0_14 = arith.constant 0 : index
    %c0_15 = arith.constant 0 : index
    %34 = vector.load %arg6[%c0_14, %c0_15] : memref<16x96xbf16, #tpu.memory_space<vmem>>, vector<16x96xbf16>
    tpu.vector_store %arg6[%c0_14, %c0_15], %33 {strides = array<i32>} : memref<16x96xbf16, #tpu.memory_space<vmem>>, vector<16x96xbf16>,
    return
  }
  func.func @transform_0(%arg0: i32) -> (i32, i32) {
    %c0_i32 = arith.constant 0 : i32
    %c0_i32_0 = arith.constant 0 : i32
    return %arg0, %c0_i32 : i32, i32
  }
  func.func @transform_1(%arg0: i32) -> (i32, i32) {
    %c0_i32 = arith.constant 0 : i32
    %c0_i32_0 = arith.constant 0 : i32
    %c0_i32_1 = arith.constant 0 : i32
    return %c0_i32, %c0_i32_0 : i32, i32
  }
  func.func @transform_2(%arg0: i32) -> (i32, i32) {
    %c0_i32 = arith.constant 0 : i32
    %c0_i32_0 = arith.constant 0 : i32
    %c0_i32_1 = arith.constant 0 : i32
    return %c0_i32, %c0_i32_0 : i32, i32
  }
  func.func @transform_3(%arg0: i32) -> (i32, i32) {
    %c0_i32 = arith.constant 0 : i32
    %c0_i32_0 = arith.constant 0 : i32
    %c0_i32_1 = arith.constant 0 : i32
    return %c0_i32, %c0_i32_0 : i32, i32
  }
  func.func @transform_4(%arg0: i32) -> (i32, i32) {
    %c0_i32 = arith.constant 0 : i32
    %c0_i32_0 = arith.constant 0 : i32
    %c0_i32_1 = arith.constant 0 : i32
    return %c0_i32, %c0_i32_0 : i32, i32
  }
  func.func @transform_5(%arg0: i32) -> (i32, i32) {
    %c0_i32 = arith.constant 0 : i32
    %c0_i32_0 = arith.constant 0 : i32
    return %arg0, %c0_i32 : i32, i32
  }
}

module attributes {stable_mosaic.version = 11 : i64} {
  func.func @attention_kernel(%arg0: i32, %arg1: i32, %arg2: memref<8x32xbf16, #tpu.memory_space<vmem>>, %arg3: memref<8x96xbf16, #tpu.memory_space<vmem>>, %arg4: memref<8x96xbf16, #tpu.memory_space<vmem>>, %arg5: memref<32x32xbf16, #tpu.memory_space<vmem>>, %arg6: memref<1x32xbf16, #tpu.memory_space<vmem>>, %arg7: memref<8x32xbf16, #tpu.memory_space<vmem>>) attributes {dimension_semantics = [#tpu.dimension_semantics<parallel>, #tpu.dimension_semantics<parallel>], iteration_bounds = array<i64: 2, 1>, scalar_prefetch = 0 : i64, scratch_operands = 0 : i64, tpu.core_type = #tpu.core_type<tc>, window_params = [{transform_indices = @transform_0, window_bounds = array<i64: 8, 32>}, {transform_indices = @transform_1, window_bounds = array<i64: 8, 96>}, {transform_indices = @transform_2, window_bounds = array<i64: 8, 96>}, {pipeline_mode = #tpu.pipeline_mode<synchronous>, transform_indices = @transform_3, window_bounds = array<i64: 32, 32>}, {pipeline_mode = #tpu.pipeline_mode<synchronous>, transform_indices = @transform_4, window_bounds = array<i64: 1, 32>}, {transform_indices = @transform_5, window_bounds = array<i64: 8, 32>}]} {
    %c0 = arith.constant 0 : index
    %c0_0 = arith.constant 0 : index
    %0 = vector.load %arg2[%c0, %c0_0] : memref<8x32xbf16, #tpu.memory_space<vmem>>, vector<8x32xbf16>
    %1 = arith.extf %0 : vector<8x32xbf16> to vector<8x32xf32>
    %c0_1 = arith.constant 0 : index
    %c0_2 = arith.constant 0 : index
    %2 = vector.load %arg3[%c0_1, %c0_2] : memref<8x96xbf16, #tpu.memory_space<vmem>>, vector<8x96xbf16>
    %c0_3 = arith.constant 0 : index
    %c0_4 = arith.constant 0 : index
    %3 = vector.load %arg4[%c0_3, %c0_4] : memref<8x96xbf16, #tpu.memory_space<vmem>>, vector<8x96xbf16>
    %c8_i32 = arith.constant 8 : i32
    %4 = arith.muli %arg1, %c8_i32 : i32
    %5 = tpu.iota {dimensions = array<i32: 0>} : vector<8x8xi32>
    %6 = vector.broadcast %4 : i32 to vector<8x8xi32>
    %7 = arith.addi %6, %5 : vector<8x8xi32>
    %8 = tpu.iota {dimensions = array<i32: 1>} : vector<8x8xi32>
    %9 = arith.cmpi sgt, %8, %7 : vector<8x8xi32>
    %cst = arith.constant 0.000000e+00 : f32
    %10 = vector.broadcast %cst : f32 to vector<8x32xf32>
    %11 = vector.extract_strided_slice %2 {offsets = [0, 0], sizes = [8, 8], strides = [1, 1]} : vector<8x96xbf16> to vector<8x8xbf16>
    %12 = vector.extract_strided_slice %3 {offsets = [0, 32], sizes = [8, 8], strides = [1, 1]} : vector<8x96xbf16> to vector<8x8xbf16>
    %13 = vector.extract_strided_slice %3 {offsets = [0, 64], sizes = [8, 8], strides = [1, 1]} : vector<8x96xbf16> to vector<8x8xbf16>
    %cst_5 = arith.constant dense<0.000000e+00> : vector<8x8xf32>
    %14 = tpu.matmul %11, %12, %cst_5 {dimension_numbers = #tpu.dot_dimension_numbers<[1], [1], [0], [0], [0, 0, 1, 0], [], []>} : vector<8x8xbf16>, vector<8x8xbf16>, vector<8x8xf32> -> vector<8x8xf32>
    %cst_6 = arith.constant -1.000000e+30 : f32
    %15 = vector.broadcast %cst_6 : f32 to vector<8x8xf32>
    %16 = arith.select %9, %15, %14 : vector<8x8xi1>, vector<8x8xf32>
    %cst_7 = arith.constant dense<0xFF800000> : vector<8xf32>
    %17 = vector.multi_reduction <maximumf>, %16, %cst_7 [1] : vector<8x8xf32> to vector<8xf32>
    %18 = vector.shape_cast %17 : vector<8xf32> to vector<8x1xf32>
    %19 = vector.broadcast %18 : vector<8x1xf32> to vector<8x8xf32>
    %20 = arith.subf %16, %19 : vector<8x8xf32>
    %21 = math.exp %20 : vector<8x8xf32>
    %cst_8 = arith.constant dense<0.000000e+00> : vector<8xf32>
    %22 = vector.multi_reduction <add>, %21, %cst_8 [1] : vector<8x8xf32> to vector<8xf32>
    %23 = vector.shape_cast %22 : vector<8xf32> to vector<8x1xf32>
    %24 = vector.broadcast %23 : vector<8x1xf32> to vector<8x8xf32>
    %25 = arith.divf %21, %24 : vector<8x8xf32>
    %26 = arith.truncf %25 : vector<8x8xf32> to vector<8x8xbf16>
    %cst_9 = arith.constant dense<0.000000e+00> : vector<8x8xf32>
    %27 = tpu.matmul %26, %13, %cst_9 {dimension_numbers = #tpu.dot_dimension_numbers<[1], [0], [0], [1], [0, 0, 1, 1], [], []>} : vector<8x8xbf16>, vector<8x8xbf16>, vector<8x8xf32> -> vector<8x8xf32>
    %c0_10 = arith.constant 0 : index
    %c0_11 = arith.constant 0 : index
    %28 = vector.load %arg5[%c0_10, %c0_11] : memref<32x32xbf16, #tpu.memory_space<vmem>>, vector<8x32xbf16>
    %29 = arith.truncf %27 : vector<8x8xf32> to vector<8x8xbf16>
    %cst_12 = arith.constant dense<0.000000e+00> : vector<8x32xf32>
    %30 = tpu.matmul %29, %28, %cst_12 {dimension_numbers = #tpu.dot_dimension_numbers<[1], [0], [0], [1], [0, 0, 1, 1], [], []>} : vector<8x8xbf16>, vector<8x32xbf16>, vector<8x32xf32> -> vector<8x32xf32>
    %31 = arith.addf %10, %30 : vector<8x32xf32>
    %32 = vector.extract_strided_slice %2 {offsets = [0, 8], sizes = [8, 8], strides = [1, 1]} : vector<8x96xbf16> to vector<8x8xbf16>
    %33 = vector.extract_strided_slice %3 {offsets = [0, 40], sizes = [8, 8], strides = [1, 1]} : vector<8x96xbf16> to vector<8x8xbf16>
    %34 = vector.extract_strided_slice %3 {offsets = [0, 72], sizes = [8, 8], strides = [1, 1]} : vector<8x96xbf16> to vector<8x8xbf16>
    %cst_13 = arith.constant dense<0.000000e+00> : vector<8x8xf32>
    %35 = tpu.matmul %32, %33, %cst_13 {dimension_numbers = #tpu.dot_dimension_numbers<[1], [1], [0], [0], [0, 0, 1, 0], [], []>} : vector<8x8xbf16>, vector<8x8xbf16>, vector<8x8xf32> -> vector<8x8xf32>
    %cst_14 = arith.constant -1.000000e+30 : f32
    %36 = vector.broadcast %cst_14 : f32 to vector<8x8xf32>
    %37 = arith.select %9, %36, %35 : vector<8x8xi1>, vector<8x8xf32>
    %cst_15 = arith.constant dense<0xFF800000> : vector<8xf32>
    %38 = vector.multi_reduction <maximumf>, %37, %cst_15 [1] : vector<8x8xf32> to vector<8xf32>
    %39 = vector.shape_cast %38 : vector<8xf32> to vector<8x1xf32>
    %40 = vector.broadcast %39 : vector<8x1xf32> to vector<8x8xf32>
    %41 = arith.subf %37, %40 : vector<8x8xf32>
    %42 = math.exp %41 : vector<8x8xf32>
    %cst_16 = arith.constant dense<0.000000e+00> : vector<8xf32>
    %43 = vector.multi_reduction <add>, %42, %cst_16 [1] : vector<8x8xf32> to vector<8xf32>
    %44 = vector.shape_cast %43 : vector<8xf32> to vector<8x1xf32>
    %45 = vector.broadcast %44 : vector<8x1xf32> to vector<8x8xf32>
    %46 = arith.divf %42, %45 : vector<8x8xf32>
    %47 = arith.truncf %46 : vector<8x8xf32> to vector<8x8xbf16>
    %cst_17 = arith.constant dense<0.000000e+00> : vector<8x8xf32>
    %48 = tpu.matmul %47, %34, %cst_17 {dimension_numbers = #tpu.dot_dimension_numbers<[1], [0], [0], [1], [0, 0, 1, 1], [], []>} : vector<8x8xbf16>, vector<8x8xbf16>, vector<8x8xf32> -> vector<8x8xf32>
    %c8 = arith.constant 8 : index
    %c0_18 = arith.constant 0 : index
    %49 = vector.load %arg5[%c8, %c0_18] : memref<32x32xbf16, #tpu.memory_space<vmem>>, vector<8x32xbf16>
    %50 = arith.truncf %48 : vector<8x8xf32> to vector<8x8xbf16>
    %cst_19 = arith.constant dense<0.000000e+00> : vector<8x32xf32>
    %51 = tpu.matmul %50, %49, %cst_19 {dimension_numbers = #tpu.dot_dimension_numbers<[1], [0], [0], [1], [0, 0, 1, 1], [], []>} : vector<8x8xbf16>, vector<8x32xbf16>, vector<8x32xf32> -> vector<8x32xf32>
    %52 = arith.addf %31, %51 : vector<8x32xf32>
    %53 = vector.extract_strided_slice %2 {offsets = [0, 16], sizes = [8, 8], strides = [1, 1]} : vector<8x96xbf16> to vector<8x8xbf16>
    %54 = vector.extract_strided_slice %3 {offsets = [0, 48], sizes = [8, 8], strides = [1, 1]} : vector<8x96xbf16> to vector<8x8xbf16>
    %55 = vector.extract_strided_slice %3 {offsets = [0, 80], sizes = [8, 8], strides = [1, 1]} : vector<8x96xbf16> to vector<8x8xbf16>
    %cst_20 = arith.constant dense<0.000000e+00> : vector<8x8xf32>
    %56 = tpu.matmul %53, %54, %cst_20 {dimension_numbers = #tpu.dot_dimension_numbers<[1], [1], [0], [0], [0, 0, 1, 0], [], []>} : vector<8x8xbf16>, vector<8x8xbf16>, vector<8x8xf32> -> vector<8x8xf32>
    %cst_21 = arith.constant -1.000000e+30 : f32
    %57 = vector.broadcast %cst_21 : f32 to vector<8x8xf32>
    %58 = arith.select %9, %57, %56 : vector<8x8xi1>, vector<8x8xf32>
    %cst_22 = arith.constant dense<0xFF800000> : vector<8xf32>
    %59 = vector.multi_reduction <maximumf>, %58, %cst_22 [1] : vector<8x8xf32> to vector<8xf32>
    %60 = vector.shape_cast %59 : vector<8xf32> to vector<8x1xf32>
    %61 = vector.broadcast %60 : vector<8x1xf32> to vector<8x8xf32>
    %62 = arith.subf %58, %61 : vector<8x8xf32>
    %63 = math.exp %62 : vector<8x8xf32>
    %cst_23 = arith.constant dense<0.000000e+00> : vector<8xf32>
    %64 = vector.multi_reduction <add>, %63, %cst_23 [1] : vector<8x8xf32> to vector<8xf32>
    %65 = vector.shape_cast %64 : vector<8xf32> to vector<8x1xf32>
    %66 = vector.broadcast %65 : vector<8x1xf32> to vector<8x8xf32>
    %67 = arith.divf %63, %66 : vector<8x8xf32>
    %68 = arith.truncf %67 : vector<8x8xf32> to vector<8x8xbf16>
    %cst_24 = arith.constant dense<0.000000e+00> : vector<8x8xf32>
    %69 = tpu.matmul %68, %55, %cst_24 {dimension_numbers = #tpu.dot_dimension_numbers<[1], [0], [0], [1], [0, 0, 1, 1], [], []>} : vector<8x8xbf16>, vector<8x8xbf16>, vector<8x8xf32> -> vector<8x8xf32>
    %c16 = arith.constant 16 : index
    %c0_25 = arith.constant 0 : index
    %70 = vector.load %arg5[%c16, %c0_25] : memref<32x32xbf16, #tpu.memory_space<vmem>>, vector<8x32xbf16>
    %71 = arith.truncf %69 : vector<8x8xf32> to vector<8x8xbf16>
    %cst_26 = arith.constant dense<0.000000e+00> : vector<8x32xf32>
    %72 = tpu.matmul %71, %70, %cst_26 {dimension_numbers = #tpu.dot_dimension_numbers<[1], [0], [0], [1], [0, 0, 1, 1], [], []>} : vector<8x8xbf16>, vector<8x32xbf16>, vector<8x32xf32> -> vector<8x32xf32>
    %73 = arith.addf %52, %72 : vector<8x32xf32>
    %74 = vector.extract_strided_slice %2 {offsets = [0, 24], sizes = [8, 8], strides = [1, 1]} : vector<8x96xbf16> to vector<8x8xbf16>
    %75 = vector.extract_strided_slice %3 {offsets = [0, 56], sizes = [8, 8], strides = [1, 1]} : vector<8x96xbf16> to vector<8x8xbf16>
    %76 = vector.extract_strided_slice %3 {offsets = [0, 88], sizes = [8, 8], strides = [1, 1]} : vector<8x96xbf16> to vector<8x8xbf16>
    %cst_27 = arith.constant dense<0.000000e+00> : vector<8x8xf32>
    %77 = tpu.matmul %74, %75, %cst_27 {dimension_numbers = #tpu.dot_dimension_numbers<[1], [1], [0], [0], [0, 0, 1, 0], [], []>} : vector<8x8xbf16>, vector<8x8xbf16>, vector<8x8xf32> -> vector<8x8xf32>
    %cst_28 = arith.constant -1.000000e+30 : f32
    %78 = vector.broadcast %cst_28 : f32 to vector<8x8xf32>
    %79 = arith.select %9, %78, %77 : vector<8x8xi1>, vector<8x8xf32>
    %cst_29 = arith.constant dense<0xFF800000> : vector<8xf32>
    %80 = vector.multi_reduction <maximumf>, %79, %cst_29 [1] : vector<8x8xf32> to vector<8xf32>
    %81 = vector.shape_cast %80 : vector<8xf32> to vector<8x1xf32>
    %82 = vector.broadcast %81 : vector<8x1xf32> to vector<8x8xf32>
    %83 = arith.subf %79, %82 : vector<8x8xf32>
    %84 = math.exp %83 : vector<8x8xf32>
    %cst_30 = arith.constant dense<0.000000e+00> : vector<8xf32>
    %85 = vector.multi_reduction <add>, %84, %cst_30 [1] : vector<8x8xf32> to vector<8xf32>
    %86 = vector.shape_cast %85 : vector<8xf32> to vector<8x1xf32>
    %87 = vector.broadcast %86 : vector<8x1xf32> to vector<8x8xf32>
    %88 = arith.divf %84, %87 : vector<8x8xf32>
    %89 = arith.truncf %88 : vector<8x8xf32> to vector<8x8xbf16>
    %cst_31 = arith.constant dense<0.000000e+00> : vector<8x8xf32>
    %90 = tpu.matmul %89, %76, %cst_31 {dimension_numbers = #tpu.dot_dimension_numbers<[1], [0], [0], [1], [0, 0, 1, 1], [], []>} : vector<8x8xbf16>, vector<8x8xbf16>, vector<8x8xf32> -> vector<8x8xf32>
    %c24 = arith.constant 24 : index
    %c0_32 = arith.constant 0 : index
    %91 = vector.load %arg5[%c24, %c0_32] : memref<32x32xbf16, #tpu.memory_space<vmem>>, vector<8x32xbf16>
    %92 = arith.truncf %90 : vector<8x8xf32> to vector<8x8xbf16>
    %cst_33 = arith.constant dense<0.000000e+00> : vector<8x32xf32>
    %93 = tpu.matmul %92, %91, %cst_33 {dimension_numbers = #tpu.dot_dimension_numbers<[1], [0], [0], [1], [0, 0, 1, 1], [], []>} : vector<8x8xbf16>, vector<8x32xbf16>, vector<8x32xf32> -> vector<8x32xf32>
    %94 = arith.addf %73, %93 : vector<8x32xf32>
    %95 = arith.addf %1, %94 : vector<8x32xf32>
    %c0_34 = arith.constant 0 : index
    %c0_35 = arith.constant 0 : index
    %96 = vector.load %arg6[%c0_34, %c0_35] : memref<1x32xbf16, #tpu.memory_space<vmem>>, vector<1x32xbf16>
    %97 = arith.extf %96 : vector<1x32xbf16> to vector<1x32xf32>
    %98 = vector.broadcast %97 : vector<1x32xf32> to vector<8x32xf32>
    %99 = arith.addf %95, %98 : vector<8x32xf32>
    %100 = arith.truncf %99 : vector<8x32xf32> to vector<8x32xbf16>
    %c0_36 = arith.constant 0 : index
    %c0_37 = arith.constant 0 : index
    %101 = vector.load %arg7[%c0_36, %c0_37] : memref<8x32xbf16, #tpu.memory_space<vmem>>, vector<8x32xbf16>
    tpu.vector_store %arg7[%c0_36, %c0_37], %100 {strides = array<i32>} : memref<8x32xbf16, #tpu.memory_space<vmem>>, vector<8x32xbf16>,
    return
  }
  func.func @transform_0(%arg0: i32, %arg1: i32) -> (i32, i32) {
    %c1_i32 = arith.constant 1 : i32
    %0 = arith.muli %arg0, %c1_i32 : i32
    %1 = arith.addi %0, %arg1 : i32
    %c0_i32 = arith.constant 0 : i32
    %c0_i32_0 = arith.constant 0 : i32
    return %1, %c0_i32 : i32, i32
  }
  func.func @transform_1(%arg0: i32, %arg1: i32) -> (i32, i32) {
    %c1_i32 = arith.constant 1 : i32
    %0 = arith.muli %arg0, %c1_i32 : i32
    %1 = arith.addi %0, %arg1 : i32
    %c0_i32 = arith.constant 0 : i32
    %c0_i32_0 = arith.constant 0 : i32
    return %1, %c0_i32 : i32, i32
  }
  func.func @transform_2(%arg0: i32, %arg1: i32) -> (i32, i32) {
    %c0_i32 = arith.constant 0 : i32
    %c0_i32_0 = arith.constant 0 : i32
    return %arg0, %c0_i32 : i32, i32
  }
  func.func @transform_3(%arg0: i32, %arg1: i32) -> (i32, i32) {
    %c0_i32 = arith.constant 0 : i32
    %c0_i32_0 = arith.constant 0 : i32
    %c0_i32_1 = arith.constant 0 : i32
    return %c0_i32, %c0_i32_0 : i32, i32
  }
  func.func @transform_4(%arg0: i32, %arg1: i32) -> (i32, i32) {
    %c0_i32 = arith.constant 0 : i32
    %c0_i32_0 = arith.constant 0 : i32
    %c0_i32_1 = arith.constant 0 : i32
    return %c0_i32, %c0_i32_0 : i32, i32
  }
  func.func @transform_5(%arg0: i32, %arg1: i32) -> (i32, i32) {
    %c1_i32 = arith.constant 1 : i32
    %0 = arith.muli %arg0, %c1_i32 : i32
    %1 = arith.addi %0, %arg1 : i32
    %c0_i32 = arith.constant 0 : i32
    %c0_i32_0 = arith.constant 0 : i32
    return %1, %c0_i32 : i32, i32
  }
}

module attributes {stable_mosaic.version = 11 : i64} {
  func.func @mlp_kernel(%arg0: i32, %arg1: memref<16x32xbf16, #tpu.memory_space<vmem>>, %arg2: memref<1x32xf32, #tpu.memory_space<vmem>>, %arg3: memref<1x32xf32, #tpu.memory_space<vmem>>, %arg4: memref<32x128xbf16, #tpu.memory_space<vmem>>, %arg5: memref<1x128xbf16, #tpu.memory_space<vmem>>, %arg6: memref<128x32xbf16, #tpu.memory_space<vmem>>, %arg7: memref<1x32xbf16, #tpu.memory_space<vmem>>, %arg8: memref<16x32xbf16, #tpu.memory_space<vmem>>) attributes {dimension_semantics = [#tpu.dimension_semantics<parallel>], iteration_bounds = array<i64: 1>, scalar_prefetch = 0 : i64, scratch_operands = 0 : i64, tpu.core_type = #tpu.core_type<tc>, window_params = [{transform_indices = @transform_0, window_bounds = array<i64: 16, 32>}, {pipeline_mode = #tpu.pipeline_mode<synchronous>, transform_indices = @transform_1, window_bounds = array<i64: 1, 32>}, {pipeline_mode = #tpu.pipeline_mode<synchronous>, transform_indices = @transform_2, window_bounds = array<i64: 1, 32>}, {pipeline_mode = #tpu.pipeline_mode<synchronous>, transform_indices = @transform_3, window_bounds = array<i64: 32, 128>}, {pipeline_mode = #tpu.pipeline_mode<synchronous>, transform_indices = @transform_4, window_bounds = array<i64: 1, 128>}, {pipeline_mode = #tpu.pipeline_mode<synchronous>, transform_indices = @transform_5, window_bounds = array<i64: 128, 32>}, {pipeline_mode = #tpu.pipeline_mode<synchronous>, transform_indices = @transform_6, window_bounds = array<i64: 1, 32>}, {transform_indices = @transform_7, window_bounds = array<i64: 16, 32>}]} {
    %c0 = arith.constant 0 : index
    %c0_0 = arith.constant 0 : index
    %0 = vector.load %arg1[%c0, %c0_0] : memref<16x32xbf16, #tpu.memory_space<vmem>>, vector<16x32xbf16>
    %1 = arith.extf %0 : vector<16x32xbf16> to vector<16x32xf32>
    %c0_1 = arith.constant 0 : index
    %c0_2 = arith.constant 0 : index
    %2 = vector.load %arg2[%c0_1, %c0_2] : memref<1x32xf32, #tpu.memory_space<vmem>>, vector<1x32xf32>
    %c0_3 = arith.constant 0 : index
    %c0_4 = arith.constant 0 : index
    %3 = vector.load %arg3[%c0_3, %c0_4] : memref<1x32xf32, #tpu.memory_space<vmem>>, vector<1x32xf32>
    %cst = arith.constant dense<0.000000e+00> : vector<16xf32>
    %4 = vector.multi_reduction <add>, %1, %cst [1] : vector<16x32xf32> to vector<16xf32>
    %5 = vector.shape_cast %4 : vector<16xf32> to vector<16x1xf32>
    %cst_5 = arith.constant 3.200000e+01 : f32
    %6 = vector.broadcast %cst_5 : f32 to vector<16x1xf32>
    %7 = arith.divf %5, %6 : vector<16x1xf32>
    %8 = vector.broadcast %7 : vector<16x1xf32> to vector<16x32xf32>
    %9 = arith.subf %1, %8 : vector<16x32xf32>
    %10 = arith.mulf %9, %9 : vector<16x32xf32>
    %cst_6 = arith.constant dense<0.000000e+00> : vector<16xf32>
    %11 = vector.multi_reduction <add>, %10, %cst_6 [1] : vector<16x32xf32> to vector<16xf32>
    %12 = vector.shape_cast %11 : vector<16xf32> to vector<16x1xf32>
    %cst_7 = arith.constant 3.200000e+01 : f32
    %13 = vector.broadcast %cst_7 : f32 to vector<16x1xf32>
    %14 = arith.divf %12, %13 : vector<16x1xf32>
    %15 = vector.broadcast %7 : vector<16x1xf32> to vector<16x32xf32>
    %16 = arith.subf %1, %15 : vector<16x32xf32>
    %cst_8 = arith.constant 9.99999974E-6 : f32
    %17 = vector.broadcast %cst_8 : f32 to vector<16x1xf32>
    %18 = arith.addf %14, %17 : vector<16x1xf32>
    %19 = math.rsqrt %18 : vector<16x1xf32>
    %20 = vector.broadcast %19 : vector<16x1xf32> to vector<16x32xf32>
    %21 = arith.mulf %16, %20 : vector<16x32xf32>
    %22 = vector.broadcast %2 : vector<1x32xf32> to vector<16x32xf32>
    %23 = arith.mulf %22, %21 : vector<16x32xf32>
    %24 = vector.broadcast %3 : vector<1x32xf32> to vector<16x32xf32>
    %25 = arith.addf %23, %24 : vector<16x32xf32>
    %c0_9 = arith.constant 0 : index
    %c0_10 = arith.constant 0 : index
    %26 = vector.load %arg4[%c0_9, %c0_10] : memref<32x128xbf16, #tpu.memory_space<vmem>>, vector<32x128xbf16>
    %c0_11 = arith.constant 0 : index
    %c0_12 = arith.constant 0 : index
    %27 = vector.load %arg5[%c0_11, %c0_12] : memref<1x128xbf16, #tpu.memory_space<vmem>>, vector<1x128xbf16>
    %28 = arith.truncf %25 : vector<16x32xf32> to vector<16x32xbf16>
    %cst_13 = arith.constant dense<0.000000e+00> : vector<16x128xf32>
    %29 = tpu.matmul %28, %26, %cst_13 {dimension_numbers = #tpu.dot_dimension_numbers<[1], [0], [0], [1], [0, 0, 1, 1], [], []>} : vector<16x32xbf16>, vector<32x128xbf16>, vector<16x128xf32> -> vector<16x128xf32>
    %30 = arith.extf %27 : vector<1x128xbf16> to vector<1x128xf32>
    %31 = vector.broadcast %30 : vector<1x128xf32> to vector<16x128xf32>
    %32 = arith.addf %29, %31 : vector<16x128xf32>
    %cst_14 = arith.constant 5.000000e-01 : f32
    %33 = vector.broadcast %cst_14 : f32 to vector<16x128xf32>
    %34 = arith.mulf %33, %32 : vector<16x128xf32>
    %cst_15 = arith.constant 4.471500e-02 : f32
    %35 = vector.broadcast %cst_15 : f32 to vector<16x128xf32>
    %36 = arith.mulf %35, %32 : vector<16x128xf32>
    %37 = arith.mulf %36, %32 : vector<16x128xf32>
    %38 = arith.mulf %37, %32 : vector<16x128xf32>
    %39 = arith.addf %32, %38 : vector<16x128xf32>
    %cst_16 = arith.constant 0.797884583 : f32
    %40 = vector.broadcast %cst_16 : f32 to vector<16x128xf32>
    %41 = arith.mulf %40, %39 : vector<16x128xf32>
    %42 = math.tanh %41 : vector<16x128xf32>
    %cst_17 = arith.constant 1.000000e+00 : f32
    %43 = vector.broadcast %cst_17 : f32 to vector<16x128xf32>
    %44 = arith.addf %43, %42 : vector<16x128xf32>
    %45 = arith.mulf %34, %44 : vector<16x128xf32>
    %c0_18 = arith.constant 0 : index
    %c0_19 = arith.constant 0 : index
    %46 = vector.load %arg6[%c0_18, %c0_19] : memref<128x32xbf16, #tpu.memory_space<vmem>>, vector<128x32xbf16>
    %c0_20 = arith.constant 0 : index
    %c0_21 = arith.constant 0 : index
    %47 = vector.load %arg7[%c0_20, %c0_21] : memref<1x32xbf16, #tpu.memory_space<vmem>>, vector<1x32xbf16>
    %48 = arith.truncf %45 : vector<16x128xf32> to vector<16x128xbf16>
    %cst_22 = arith.constant dense<0.000000e+00> : vector<16x32xf32>
    %49 = tpu.matmul %48, %46, %cst_22 {dimension_numbers = #tpu.dot_dimension_numbers<[1], [0], [0], [1], [0, 0, 1, 1], [], []>} : vector<16x128xbf16>, vector<128x32xbf16>, vector<16x32xf32> -> vector<16x32xf32>
    %50 = arith.extf %47 : vector<1x32xbf16> to vector<1x32xf32>
    %51 = vector.broadcast %50 : vector<1x32xf32> to vector<16x32xf32>
    %52 = arith.addf %49, %51 : vector<16x32xf32>
    %53 = arith.addf %1, %52 : vector<16x32xf32>
    %54 = arith.truncf %53 : vector<16x32xf32> to vector<16x32xbf16>
    %c0_23 = arith.constant 0 : index
    %c0_24 = arith.constant 0 : index
    %55 = vector.load %arg8[%c0_23, %c0_24] : memref<16x32xbf16, #tpu.memory_space<vmem>>, vector<16x32xbf16>
    tpu.vector_store %arg8[%c0_23, %c0_24], %54 {strides = array<i32>} : memref<16x32xbf16, #tpu.memory_space<vmem>>, vector<16x32xbf16>,
    return
  }
  func.func @transform_0(%arg0: i32) -> (i32, i32) {
    %c0_i32 = arith.constant 0 : i32
    %c0_i32_0 = arith.constant 0 : i32
    return %arg0, %c0_i32 : i32, i32
  }
  func.func @transform_1(%arg0: i32) -> (i32, i32) {
    %c0_i32 = arith.constant 0 : i32
    %c0_i32_0 = arith.constant 0 : i32
    %c0_i32_1 = arith.constant 0 : i32
    return %c0_i32, %c0_i32_0 : i32, i32
  }
  func.func @transform_2(%arg0: i32) -> (i32, i32) {
    %c0_i32 = arith.constant 0 : i32
    %c0_i32_0 = arith.constant 0 : i32
    %c0_i32_1 = arith.constant 0 : i32
    return %c0_i32, %c0_i32_0 : i32, i32
  }
  func.func @transform_3(%arg0: i32) -> (i32, i32) {
    %c0_i32 = arith.constant 0 : i32
    %c0_i32_0 = arith.constant 0 : i32
    %c0_i32_1 = arith.constant 0 : i32
    return %c0_i32, %c0_i32_0 : i32, i32
  }
  func.func @transform_4(%arg0: i32) -> (i32, i32) {
    %c0_i32 = arith.constant 0 : i32
    %c0_i32_0 = arith.constant 0 : i32
    %c0_i32_1 = arith.constant 0 : i32
    return %c0_i32, %c0_i32_0 : i32, i32
  }
  func.func @transform_5(%arg0: i32) -> (i32, i32) {
    %c0_i32 = arith.constant 0 : i32
    %c0_i32_0 = arith.constant 0 : i32
    %c0_i32_1 = arith.constant 0 : i32
    return %c0_i32, %c0_i32_0 : i32, i32
  }
  func.func @transform_6(%arg0: i32) -> (i32, i32) {
    %c0_i32 = arith.constant 0 : i32
    %c0_i32_0 = arith.constant 0 : i32
    %c0_i32_1 = arith.constant 0 : i32
    return %c0_i32, %c0_i32_0 : i32, i32
  }
  func.func @transform_7(%arg0: i32) -> (i32, i32) {
    %c0_i32 = arith.constant 0 : i32
    %c0_i32_0 = arith.constant 0 : i32
    return %arg0, %c0_i32 : i32, i32
  }
}

</mosaic_0001>

<llo_original>
// kernel: gpt_forward.7
$region0: #{gpt_forward.7}
  #allocation0 [shape = 'u32[]', space=smem, size = 0x4, offset = 0x4, fixed_abs, tag = 'smem constant byte address 0x4 - core index']
  #allocation1 [shape = 'u32[72,128]{1,0:T(1,128)}', space=vmem, size = 0x9000, scoped, tag = 'internal scratch']
  %s0 = inlined_call_operand.vmem [shape: bf16[16,32], index: 0, kind: input, shape index: {}]
  %s1 = inlined_call_operand.vmem [shape: f32[1,32], index: 1, kind: input, shape index: {}]
  %s2 = inlined_call_operand.vmem [shape: f32[1,32], index: 2, kind: input, shape index: {}]
  %s3 = inlined_call_operand.vmem [shape: bf16[32,96], index: 3, kind: input, shape index: {}]
  %s4 = inlined_call_operand.vmem [shape: bf16[1,96], index: 4, kind: input, shape index: {}]
  %s5 = inlined_call_operand.vmem [shape: bf16[16,96], index: 5, kind: output, shape index: {}]
  %s6 = sld [smem:[#allocation0]]
  $region30: #{gpt_forward.7} parent=0
    _
  %s8 = ssub.s32 1, %s6
  %s9 = scalar_select 0, %s8, %s6
  // Predicated region
  $region2: #{gpt_forward.7} parent=0 // pred_check
    _
  $region3: #{gpt_forward.7} parent=0 // pred_check_branch
    %11 = sbr.rel (0) target = $region5
  $region4: #{gpt_forward.7} parent=0 // pred_region
    _
  $region5: #{gpt_forward.7} parent=0 // pred_fallthru
    _
  // Predicated region
  $region6: #{gpt_forward.7} parent=0 // pred_check
    _
  $region7: #{gpt_forward.7} parent=0 // pred_check_branch
    %13 = sbr.rel (0) target = $region9
  $region8: #{gpt_forward.7} parent=0 // pred_region
    _
  $region9: #{gpt_forward.7} parent=0 // pred_fallthru
    _
  // Predicated region
  $region10: #{gpt_forward.7} parent=0 // pred_check
    _
  $region11: #{gpt_forward.7} parent=0 // pred_check_branch
    %15 = sbr.rel (0) target = $region13
  $region12: #{gpt_forward.7} parent=0 // pred_region
    _
  $region13: #{gpt_forward.7} parent=0 // pred_fallthru
    _
  // Predicated region
  $region14: #{gpt_forward.7} parent=0 // pred_check
    _
  $region15: #{gpt_forward.7} parent=0 // pred_check_branch
    %17 = sbr.rel (0) target = $region17
  $region16: #{gpt_forward.7} parent=0 // pred_region
    _
  $region17: #{gpt_forward.7} parent=0 // pred_fallthru
    _
  // Predicated region
  $region18: #{gpt_forward.7} parent=0 // pred_check
    _
  $region19: #{gpt_forward.7} parent=0 // pred_check_branch
    %19 = sbr.rel (0) target = $region21
  $region20: #{gpt_forward.7} parent=0 // pred_region
    _
  $region21: #{gpt_forward.7} parent=0 // pred_fallthru
    _
  %v21 = vld [vmem:[%s0] sm:$0xf]
  %v22 = vld [vmem:[%s0 + $0x4] sm:$0xf]
  %v23 = vunpack.c.l.bf16 %v21
  %v24 = vunpack.c.l.bf16 %v22
  %v25 = vld [vmem:[%s1] sm:$0x1]
  %v26 = vld [vmem:[%s2] sm:$0x1]
  %vm27 = vcmask 261120
  %v28 = vsel %vm27, %v23, 0.0
  %29 = vadd.xlane.f32.xlu0 %v28
  %v30 = vpop.xlane.xlu0 %29
  %v31 = vsel %vm27, %v24, 0.0
  %32 = vadd.xlane.f32.xlu0 %v31
  %v33 = vpop.xlane.xlu0 %32
  %v34 = vrcp.pop 32.0
  %v35 = vmul.f32 32.0, %v34
  %v36 = vsub.f32 1.0, %v35
  %v37 = vmul.f32 %v34, %v36
  %v38 = vadd.f32 %v34, %v37
  %vm39 = vweird.f32 %v34
  %v40 = vsel %vm39, %v34, %v38
  %v41 = vmul.f32 %v30, %v40
  %v42 = vmul.f32 %v33, %v40
  %v43 = vsub.f32 %v23, %v41
  %v44 = vsub.f32 %v24, %v42
  %v45 = vmul.f32 %v43, %v43
  %v46 = vmul.f32 %v44, %v44
  %v47 = vsel %vm27, %v45, 0.0
  %48 = vadd.xlane.f32.xlu0 %v47
  %v49 = vpop.xlane.xlu0 %48
  %v50 = vsel %vm27, %v46, 0.0
  %51 = vadd.xlane.f32.xlu0 %v50
  %v52 = vpop.xlane.xlu0 %51
  %v53 = vmul.f32 %v49, %v40
  %v54 = vmul.f32 %v52, %v40
  %v55 = vadd.f32 %v53, 1e-05
  %v56 = vadd.f32 %v54, 1e-05
  %v57 = vrsqrt.pop %v55
  %v58 = vmul.f32 %v57, %v55
  %v59 = vmul.f32 %v58, %v57
  %v60 = vmul.f32 0.5, %v59
  %v61 = vsub.f32 1.5, %v60
  %v62 = vmul.f32 %v57, %v61
  %vm63 = vweird.f32 %v55
  %vm64 = vweird.f32 %v57
  %vm65 = vmor %vm63, %vm64
  %v66 = vsel %vm65, %v57, %v62
  %v67 = vrsqrt.pop %v56
  %v68 = vmul.f32 %v67, %v56
  %v69 = vmul.f32 %v68, %v67
  %v70 = vmul.f32 0.5, %v69
  %v71 = vsub.f32 1.5, %v70
  %v72 = vmul.f32 %v67, %v71
  %vm73 = vweird.f32 %v56
  %vm74 = vweird.f32 %v67
  %vm75 = vmor %vm73, %vm74
  %v76 = vsel %vm75, %v67, %v72
  %v77 = vmul.f32 %v43, %v66
  %v78 = vmul.f32 %v44, %v76
  %v80 = vperm.slane %v25, 0
  %v82 = vmul.f32 %v80, %v77
  %v83 = vmul.f32 %v80, %v78
  %v85 = vperm.slane %v26, 0
  %v87 = vadd.f32 %v82, %v85
  %v88 = vadd.f32 %v83, %v85
  %v89 = vld [vmem:[%s3] sm:$0xf]
  %v90 = vld [vmem:[%s3 + $0x4] sm:$0xf]
  %v91 = vld [vmem:[%s3 + $0x8] sm:$0xf]
  %v92 = vld [vmem:[%s3 + $0xc] sm:$0xf]
  %v93 = vld [vmem:[%s4] sm:$0x1]
  %v94 = vpack.c.bf16 %v88, %v87
  %v95 = vunpack.c.l.bf16 %v93
  %v96 = vperm.slane %v95, 0
  %v101 = vunpack.c.l.b16 %v89
  %v102 = vunpack.c.l.b16 %v90
  %v103 = vunpack.c.l.b16 %v91
  %v104 = vunpack.c.l.b16 %v92
  %v105 = vpack.c.b16 %v102, %v101
  %v106 = vpack.c.b16 %v104, %v103
  %v110 = vsel %vm27, %v94, 0
  %112 = vmatpush.bf16.msra.mxu0 0
  %113 = vmatpush.bf16.msra.mxu0 0
  %114 = vmatpush.bf16.msra.mxu0 0
  %115 = vmatpush.bf16.msra.mxu0 0
  %116 = vmatpush.bf16.msra.mxu0 0
  %117 = vmatpush.bf16.msra.mxu0 0
  %118 = vmatpush.bf16.msra.mxu0 %v106
  %119 = vmatpush.bf16.msra.mxu0 %v105
  %120 = vmatmul.bf16.gmra.mxu0 %v110
  %v121 = vpop.f32.mrf.mxu0
  %v122 = vadd.f32 %v96, %v121
  %v123 = vpop.f32.mrf.mxu0
  %v124 = vadd.f32 %v96, %v123
  %125 = vdwg.mxu0
  %v126 = vpack.c.bf16 %v122, %v122
  %v127 = vpack.c.bf16 %v124, %v124
  %vm128 = vcmask 781312
  %129 = vst.msk [vmem:[%s5] sm:$0xf] %vm128, %v126
  %130 = vst.msk [vmem:[%s5 + $0x4] sm:$0xf] %vm128, %v127
  // Predicated region
  $region22: #{gpt_forward.7} parent=0 // pred_check
    _
  $region23: #{gpt_forward.7} parent=0 // pred_check_branch
    %132 = sbr.rel (0) target = $region25
  $region24: #{gpt_forward.7} parent=0 // pred_region
    _
  $region25: #{gpt_forward.7} parent=0 // pred_fallthru
    _
  // Predicated region
  $region26: #{gpt_forward.7} parent=0 // pred_check
    _
  $region27: #{gpt_forward.7} parent=0 // pred_check_branch
    %134 = sbr.rel (0) target = $region29
  $region28: #{gpt_forward.7} parent=0 // pred_region
    _
  $region29: #{gpt_forward.7} parent=0 // pred_fallthru
    _

// kernel: gpt_forward.13
$region0: #{gpt_forward.13}
  #allocation0 [shape = 'u32[]', space=smem, size = 0x4, offset = 0x4, fixed_abs, tag = 'smem constant byte address 0x4 - core index']
  #allocation1 [shape = 'u32[72,128]{1,0:T(1,128)}', space=vmem, size = 0x9000, scoped, tag = 'internal scratch']
  %s0 = inlined_call_operand.vmem [shape: bf16[16,32], index: 0, kind: input, shape index: {}]
  %s1 = inlined_call_operand.vmem [shape: f32[1,32], index: 1, kind: input, shape index: {}]
  %s2 = inlined_call_operand.vmem [shape: f32[1,32], index: 2, kind: input, shape index: {}]
  %s3 = inlined_call_operand.vmem [shape: bf16[32,128], index: 3, kind: input, shape index: {}]
  %s4 = inlined_call_operand.vmem [shape: bf16[1,128], index: 4, kind: input, shape index: {}]
  %s5 = inlined_call_operand.hbm [shape: f32[16,128], index: 5, kind: output, shape index: {}]
  %s6 = sld [smem:[#allocation0]]
  $region30: #{gpt_forward.13} parent=0
    _
  %s8 = ssub.s32 1, %s6
  %s9 = scalar_select 0, %s8, %s6
  $region1: #{gpt_forward.13} parent=0
    #allocation2 [shape = 'u8[8192]{0}', space=vmem, size = 0x2000, scoped, tag = 'output window, operand 0, single buffered']
    #allocation3 [shape = 's32[1]{0}', space=sflag, size = 0x4, scoped, tag = 'scoped memory for gpt_forward.13']
    %10 = vsyncpa [#allocation3], 0
    // Predicated region
    $region2: #{gpt_forward.13} parent=1 // pred_check
      _
    $region3: #{gpt_forward.13} parent=1 // pred_check_branch
      %12 = sbr.rel (0) target = $region5
    $region4: #{gpt_forward.13} parent=1 // pred_region
      _
    $region5: #{gpt_forward.13} parent=1 // pred_fallthru
      _
    // Predicated region
    $region6: #{gpt_forward.13} parent=1 // pred_check
      _
    $region7: #{gpt_forward.13} parent=1 // pred_check_branch
      %14 = sbr.rel (0) target = $region9
    $region8: #{gpt_forward.13} parent=1 // pred_region
      _
    $region9: #{gpt_forward.13} parent=1 // pred_fallthru
      _
    // Predicated region
    $region10: #{gpt_forward.13} parent=1 // pred_check
      _
    $region11: #{gpt_forward.13} parent=1 // pred_check_branch
      %16 = sbr.rel (0) target = $region13
    $region12: #{gpt_forward.13} parent=1 // pred_region
      _
    $region13: #{gpt_forward.13} parent=1 // pred_fallthru
      _
    // Predicated region
    $region14: #{gpt_forward.13} parent=1 // pred_check
      _
    $region15: #{gpt_forward.13} parent=1 // pred_check_branch
      %18 = sbr.rel (0) target = $region17
    $region16: #{gpt_forward.13} parent=1 // pred_region
      _
    $region17: #{gpt_forward.13} parent=1 // pred_fallthru
      _
    // Predicated region
    $region18: #{gpt_forward.13} parent=1 // pred_check
      _
    $region19: #{gpt_forward.13} parent=1 // pred_check_branch
      %20 = sbr.rel (0) target = $region21
    $region20: #{gpt_forward.13} parent=1 // pred_region
      _
    $region21: #{gpt_forward.13} parent=1 // pred_fallthru
      _
    %v22 = vld [vmem:[%s0] sm:$0xf]
    %v23 = vld [vmem:[%s0 + $0x4] sm:$0xf]
    %v24 = vunpack.c.l.bf16 %v22
    %v25 = vunpack.c.l.bf16 %v23
    %v26 = vld [vmem:[%s1] sm:$0x1]
    %v27 = vld [vmem:[%s2] sm:$0x1]
    %vm28 = vcmask 261120
    %v29 = vsel %vm28, %v24, 0.0
    %30 = vadd.xlane.f32.xlu0 %v29
    %v31 = vpop.xlane.xlu0 %30
    %v32 = vsel %vm28, %v25, 0.0
    %33 = vadd.xlane.f32.xlu0 %v32
    %v34 = vpop.xlane.xlu0 %33
    %v35 = vrcp.pop 32.0
    %v36 = vmul.f32 32.0, %v35
    %v37 = vsub.f32 1.0, %v36
    %v38 = vmul.f32 %v35, %v37
    %v39 = vadd.f32 %v35, %v38
    %vm40 = vweird.f32 %v35
    %v41 = vsel %vm40, %v35, %v39
    %v42 = vmul.f32 %v31, %v41
    %v43 = vmul.f32 %v34, %v41
    %v44 = vsub.f32 %v24, %v42
    %v45 = vsub.f32 %v25, %v43
    %v46 = vmul.f32 %v44, %v44
    %v47 = vmul.f32 %v45, %v45
    %v48 = vsel %vm28, %v46, 0.0
    %49 = vadd.xlane.f32.xlu0 %v48
    %v50 = vpop.xlane.xlu0 %49
    %v51 = vsel %vm28, %v47, 0.0
    %52 = vadd.xlane.f32.xlu0 %v51
    %v53 = vpop.xlane.xlu0 %52
    %v54 = vmul.f32 %v50, %v41
    %v55 = vmul.f32 %v53, %v41
    %v56 = vadd.f32 %v54, 1e-05
    %v57 = vadd.f32 %v55, 1e-05
    %v58 = vrsqrt.pop %v56
    %v59 = vmul.f32 %v58, %v56
    %v60 = vmul.f32 %v59, %v58
    %v61 = vmul.f32 0.5, %v60
    %v62 = vsub.f32 1.5, %v61
    %v63 = vmul.f32 %v58, %v62
    %vm64 = vweird.f32 %v56
    %vm65 = vweird.f32 %v58
    %vm66 = vmor %vm64, %vm65
    %v67 = vsel %vm66, %v58, %v63
    %v68 = vrsqrt.pop %v57
    %v69 = vmul.f32 %v68, %v57
    %v70 = vmul.f32 %v69, %v68
    %v71 = vmul.f32 0.5, %v70
    %v72 = vsub.f32 1.5, %v71
    %v73 = vmul.f32 %v68, %v72
    %vm74 = vweird.f32 %v57
    %vm75 = vweird.f32 %v68
    %vm76 = vmor %vm74, %vm75
    %v77 = vsel %vm76, %v68, %v73
    %v78 = vmul.f32 %v44, %v67
    %v79 = vmul.f32 %v45, %v77
    %v81 = vperm.slane %v26, 0
    %v83 = vmul.f32 %v81, %v78
    %v84 = vmul.f32 %v81, %v79
    %v86 = vperm.slane %v27, 0
    %v88 = vadd.f32 %v83, %v86
    %v89 = vadd.f32 %v84, %v86
    %v90 = vld [vmem:[%s3] sm:$0xf]
    %v91 = vld [vmem:[%s3 + $0x4] sm:$0xf]
    %v92 = vld [vmem:[%s3 + $0x8] sm:$0xf]
    %v93 = vld [vmem:[%s3 + $0xc] sm:$0xf]
    %v94 = vld [vmem:[%s4] sm:$0x1]
    %v95 = vpack.c.bf16 %v89, %v88
    %v96 = vunpack.c.l.bf16 %v94
    %v97 = vperm.slane %v96, 0
    %v102 = vunpack.c.l.b16 %v90
    %v103 = vunpack.c.l.b16 %v91
    %v104 = vunpack.c.l.b16 %v92
    %v105 = vunpack.c.l.b16 %v93
    %v106 = vpack.c.b16 %v103, %v102
    %v107 = vpack.c.b16 %v105, %v104
    %v111 = vsel %vm28, %v95, 0
    %113 = vmatpush.bf16.msra.mxu0 0
    %114 = vmatpush.bf16.msra.mxu0 0
    %115 = vmatpush.bf16.msra.mxu0 0
    %116 = vmatpush.bf16.msra.mxu0 0
    %117 = vmatpush.bf16.msra.mxu0 0
    %118 = vmatpush.bf16.msra.mxu0 0
    %119 = vmatpush.bf16.msra.mxu0 %v107
    %120 = vmatpush.bf16.msra.mxu0 %v106
    %121 = vmatmul.bf16.gmra.mxu0 %v111
    %v122 = vpop.f32.mrf.mxu0
    %v123 = vadd.f32 %v97, %v122
    %v124 = vpop.f32.mrf.mxu0
    %v125 = vadd.f32 %v97, %v124
    %126 = vdwg.mxu0
    %127 = vst [vmem:[#allocation2] sm:$0xff] %v123
    %128 = vst [vmem:[#allocation2 + $0x8] sm:$0xff] %v125
    // Predicated region
    $region22: #{gpt_forward.13} parent=1 // pred_check
      _
    $region23: #{gpt_forward.13} parent=1 // pred_check_branch
      %130 = sbr.rel (0) target = $region25
    $region24: #{gpt_forward.13} parent=1 // pred_region
      %132 = vsyncadd [#allocation3], 0
      %s133 = sshll.u32 [#allocation2], 4
      %s134 = int_to_ptr.vmem [resolvable:$true] %s133
      %s135 = sshll.u32 %s5, 4
      %s136 = int_to_ptr.hbm [resolvable:$true] %s135
      %141 = dma.vmem_to_hbm [thread:$0]  %s134, 256, %s136, [#allocation3], 128, 128, 8
    $region25: #{gpt_forward.13} parent=1 // pred_fallthru
      _
    // Predicated region
    $region26: #{gpt_forward.13} parent=1 // pred_check
      _
    $region27: #{gpt_forward.13} parent=1 // pred_check_branch
      %143 = sbr.rel (0) target = $region29
    $region28: #{gpt_forward.13} parent=1 // pred_region
      %145 = dma.done [#allocation3], 256
    $region29: #{gpt_forward.13} parent=1 // pred_fallthru
      _
    %146 = vsyncpa [#allocation3], 1

// kernel: gpt_forward.8
$region0: #{gpt_forward.8}
  #allocation0 [shape = 'u32[]', space=smem, size = 0x4, offset = 0x4, fixed_abs, tag = 'smem constant byte address 0x4 - core index']
  #allocation1 [shape = 'u32[72,128]{1,0:T(1,128)}', space=vmem, size = 0x9000, scoped, tag = 'internal scratch']
  %s0 = inlined_call_operand.vmem [shape: bf16[16,32], index: 0, kind: input, shape index: {}]
  %s1 = inlined_call_operand.vmem [shape: bf16[16,96], index: 1, kind: input, shape index: {}, may-alias: {1,2}]
  %s2 = inlined_call_operand.vmem [shape: bf16[16,96], index: 2, kind: input, shape index: {}, may-alias: {1,2}]
  %s3 = inlined_call_operand.vmem [shape: bf16[32,32], index: 3, kind: input, shape index: {}]
  %s4 = inlined_call_operand.vmem [shape: bf16[1,32], index: 4, kind: input, shape index: {}]
  %s5 = inlined_call_operand.vmem [shape: bf16[16,32], index: 5, kind: output, shape index: {}]
  %s6 = sld [smem:[#allocation0]]
  $region53: #{gpt_forward.8} parent=0
    _
  %s8 = ssub.s32 1, %s6
  %s9 = scalar_select 0, %s8, %s6
  loop: start=0, step=1, limit=4
  $region2: #{gpt_forward.8} parent=0 // loop_pre_header
    _
  $region3: #{gpt_forward.8} parent=0 // loop_header
    %s11 = sphi 0, %s15
    %p12 = scmp.ge.s32.totalorder %s11, 4
    %s18 = sphi 0, %s30
    %s19 = sphi 0, %s26
    %s20 = sphi 0, %s18
    %s21 = sphi 0, %s19
    %s22 = sphi 0, %s20
    %s23 = sphi 0, %s21
    %s35 = sphi 0, %s37
    %s38 = sphi 0, %s35
    %s39 = sphi 0, %s38
    %s55 = sphi 0, %s39
    %s63 = sphi 0, %s65
    %s66 = sphi 0, %s63
    %s67 = sphi 0, %s66
    %s83 = sphi 0, %s67
    %s89 = sphi 0, %s91
    %s92 = sphi 0, %s89
    %s93 = sphi 0, %s92
    %s109 = sphi 0, %s93
    %s113 = sphi 0, %s113
    %s115 = sphi 0, %s113
    %s116 = sphi 0, %s115
    %s130 = sphi 0, %s116
    %s134 = sphi 0, %s134
    %s136 = sphi 0, %s134
    %s137 = sphi 0, %s136
    %s151 = sphi 0, %s137
    %s159 = sphi 0, %s161
    %s162 = sphi 0, %s159
    %s163 = sphi 0, %s162
    %s179 = sphi 0, %s163
  $region4: #{gpt_forward.8} parent=0 // loop_header_branch
    %14 = sbr.rel (%p12) target = $region8
  $region5: #{gpt_forward.8} parent=0 // loop_body
    %s16 = ssub.s32 %s11, 1
    %s17 = ssub.s32 %s11, 2
    %s24 = sadd.s32 1, %s19
    %p25 = scmp.ge.s32.totalorder %s24, 1
    %s26 = scalar_select %p25, 0, %s24
    %s27 = sadd.s32 1, %s18
    %s28 = scalar_select %p25, %s27, %s18
    %p29 = scmp.ge.s32.totalorder %s28, 2
    %s30 = scalar_select %p29, 0, %s28
    %s31 = sadd.s32 %s18, %s19
    %s32 = sadd.s32 %s30, %s26
    %s33 = ssub.s32 %s31, %s32
    %p34 = scmp.eq.s32.totalorder %s33, 0
    %s36 = sadd.s32 %s35, 1
    %s37 = scalar_select %p34, %s35, %s36
    %p40 = pneg %p34
    %p41 = scmp.eq.s32.totalorder %s11, 1
    %p42 = por %p40, %p41
    %p43 = scmp.ne.s32.totalorder %s35, %s38
    %p44 = scmp.eq.s32.totalorder %s11, 0
    %p45 = por %p43, %p44
    %p46 = scmp.ne.s32.totalorder %s35, %s38
    %p47 = scmp.eq.s32.totalorder %s16, 1
    %p48 = por %p46, %p47
    %p49 = scmp.ne.s32.totalorder %s38, %s39
    %p50 = scmp.eq.s32.totalorder %s16, 0
    %p51 = por %p49, %p50
    %p52 = scmp.ne.s32.totalorder %s38, %s39
    %p53 = scmp.eq.s32.totalorder %s17, 1
    %p54 = por %p52, %p53
    %p56 = scmp.ne.s32.totalorder %s39, %s55
    %p57 = scmp.eq.s32.totalorder %s17, 0
    %p58 = por %p56, %p57
    %s59 = sadd.s32 %s18, %s19
    %s60 = sadd.s32 %s30, %s26
    %s61 = ssub.s32 %s59, %s60
    %p62 = scmp.eq.s32.totalorder %s61, 0
    %s64 = sadd.s32 %s63, 1
    %s65 = scalar_select %p62, %s63, %s64
    %p68 = pneg %p62
    %p69 = scmp.eq.s32.totalorder %s11, 1
    %p70 = por %p68, %p69
    %p71 = scmp.ne.s32.totalorder %s63, %s66
    %p72 = scmp.eq.s32.totalorder %s11, 0
    %p73 = por %p71, %p72
    %p74 = scmp.ne.s32.totalorder %s63, %s66
    %p75 = scmp.eq.s32.totalorder %s16, 1
    %p76 = por %p74, %p75
    %p77 = scmp.ne.s32.totalorder %s66, %s67
    %p78 = scmp.eq.s32.totalorder %s16, 0
    %p79 = por %p77, %p78
    %p80 = scmp.ne.s32.totalorder %s66, %s67
    %p81 = scmp.eq.s32.totalorder %s17, 1
    %p82 = por %p80, %p81
    %p84 = scmp.ne.s32.totalorder %s67, %s83
    %p85 = scmp.eq.s32.totalorder %s17, 0
    %p86 = por %p84, %p85
    %s87 = ssub.s32 %s18, %s30
    %p88 = scmp.eq.s32.totalorder %s87, 0
    %s90 = sadd.s32 %s89, 1
    %s91 = scalar_select %p88, %s89, %s90
    %p94 = pneg %p88
    %p95 = scmp.eq.s32.totalorder %s11, 1
    %p96 = por %p94, %p95
    %p97 = scmp.ne.s32.totalorder %s89, %s92
    %p98 = scmp.eq.s32.totalorder %s11, 0
    %p99 = por %p97, %p98
    %p100 = scmp.ne.s32.totalorder %s89, %s92
    %p101 = scmp.eq.s32.totalorder %s16, 1
    %p102 = por %p100, %p101
    %p103 = scmp.ne.s32.totalorder %s92, %s93
    %p104 = scmp.eq.s32.totalorder %s16, 0
    %p105 = por %p103, %p104
    %p106 = scmp.ne.s32.totalorder %s92, %s93
    %p107 = scmp.eq.s32.totalorder %s17, 1
    %p108 = por %p106, %p107
    %p110 = scmp.ne.s32.totalorder %s93, %s109
    %p111 = scmp.eq.s32.totalorder %s17, 0
    %p112 = por %p110, %p111
    %s114 = sadd.s32 %s113, 1
    %p117 = scmp.eq.s32.totalorder %s11, 1
    %p118 = scmp.ne.s32.totalorder %s113, %s115
    %p119 = scmp.eq.s32.totalorder %s11, 0
    %p120 = por %p118, %p119
    %p121 = scmp.ne.s32.totalorder %s113, %s115
    %p122 = scmp.eq.s32.totalorder %s16, 1
    %p123 = por %p121, %p122
    %p124 = scmp.ne.s32.totalorder %s115, %s116
    %p125 = scmp.eq.s32.totalorder %s16, 0
    %p126 = por %p124, %p125
    %p127 = scmp.ne.s32.totalorder %s115, %s116
    %p128 = scmp.eq.s32.totalorder %s17, 1
    %p129 = por %p127, %p128
    %p131 = scmp.ne.s32.totalorder %s116, %s130
    %p132 = scmp.eq.s32.totalorder %s17, 0
    %p133 = por %p131, %p132
    %s135 = sadd.s32 %s134, 1
    %p138 = scmp.eq.s32.totalorder %s11, 1
    %p139 = scmp.ne.s32.totalorder %s134, %s136
    %p140 = scmp.eq.s32.totalorder %s11, 0
    %p141 = por %p139, %p140
    %p142 = scmp.ne.s32.totalorder %s134, %s136
    %p143 = scmp.eq.s32.totalorder %s16, 1
    %p144 = por %p142, %p143
    %p145 = scmp.ne.s32.totalorder %s136, %s137
    %p146 = scmp.eq.s32.totalorder %s16, 0
    %p147 = por %p145, %p146
    %p148 = scmp.ne.s32.totalorder %s136, %s137
    %p149 = scmp.eq.s32.totalorder %s17, 1
    %p150 = por %p148, %p149
    %p152 = scmp.ne.s32.totalorder %s137, %s151
    %p153 = scmp.eq.s32.totalorder %s17, 0
    %p154 = por %p152, %p153
    %s155 = sadd.s32 %s18, %s19
    %s156 = sadd.s32 %s30, %s26
    %s157 = ssub.s32 %s155, %s156
    %p158 = scmp.eq.s32.totalorder %s157, 0
    %s160 = sadd.s32 %s159, 1
    %s161 = scalar_select %p158, %s159, %s160
    %p164 = pneg %p158
    %p165 = scmp.eq.s32.totalorder %s11, 1
    %p166 = por %p164, %p165
    %p167 = scmp.ne.s32.totalorder %s159, %s162
    %p168 = scmp.eq.s32.totalorder %s11, 0
    %p169 = por %p167, %p168
    %p170 = scmp.ne.s32.totalorder %s159, %s162
    %p171 = scmp.eq.s32.totalorder %s16, 1
    %p172 = por %p170, %p171
    %p173 = scmp.ne.s32.totalorder %s162, %s163
    %p174 = scmp.eq.s32.totalorder %s16, 0
    %p175 = por %p173, %p174
    %p176 = scmp.ne.s32.totalorder %s162, %s163
    %p177 = scmp.eq.s32.totalorder %s17, 1
    %p178 = por %p176, %p177
    %p180 = scmp.ne.s32.totalorder %s163, %s179
    %p181 = scmp.eq.s32.totalorder %s17, 0
    %p182 = por %p180, %p181
    %p183 = scmp.le.s32.totalorder 1, %s11
    %p184 = scmp.lt.s32.totalorder %s11, 3
    %p185 = pnand %p183, %p184
    %p186 = pneg %p185
    // Predicated region
    $region9: #{gpt_forward.8} parent=5 // pred_check
      _
    $region10: #{gpt_forward.8} parent=5 // pred_check_branch
      %188 = sbr.rel (%p185) target = $region12
    $region11: #{gpt_forward.8} parent=5 // pred_region
      %s189 = ssub.s32 %s11, 1
      // Predicated region
      $region13: #{gpt_forward.8} parent=11 // pred_check
        %p190 = pneg %p126
      $region14: #{gpt_forward.8} parent=11 // pred_check_branch
        %192 = sbr.rel (%p190) target = $region16
      $region15: #{gpt_forward.8} parent=11 // pred_region
        _
      $region16: #{gpt_forward.8} parent=11 // pred_fallthru
        _
      // Predicated region
      $region17: #{gpt_forward.8} parent=11 // pred_check
        %p193 = pneg %p147
      $region18: #{gpt_forward.8} parent=11 // pred_check_branch
        %195 = sbr.rel (%p193) target = $region20
      $region19: #{gpt_forward.8} parent=11 // pred_region
        _
      $region20: #{gpt_forward.8} parent=11 // pred_fallthru
        _
    $region12: #{gpt_forward.8} parent=5 // pred_fallthru
      _
    %p196 = scmp.lt.s32.totalorder %s11, 2
    // Predicated region
    $region21: #{gpt_forward.8} parent=5 // pred_check
      %p197 = pneg %p196
    $region22: #{gpt_forward.8} parent=5 // pred_check_branch
      %199 = sbr.rel (%p197) target = $region24
    $region23: #{gpt_forward.8} parent=5 // pred_region
      // Predicated region
      $region25: #{gpt_forward.8} parent=23 // pred_check
        %p200 = pneg %p45
      $region26: #{gpt_forward.8} parent=23 // pred_check_branch
        %202 = sbr.rel (%p200) target = $region28
      $region27: #{gpt_forward.8} parent=23 // pred_region
        %s203 = sadd.s32 %s18, %s19
        %p204 = scmp.lt.s32.totalorder %s203, 1
        %s205 = scalar_select %p204, %s203, 1
        %s206 = smul.addr %s205, 4
        %s207 = scalar_lea.vmem %s0, %s206
        %s208 = sadd.s32 %s18, %s19
      $region28: #{gpt_forward.8} parent=23 // pred_fallthru
        _
      // Predicated region
      $region29: #{gpt_forward.8} parent=23 // pred_check
        %p209 = pneg %p73
      $region30: #{gpt_forward.8} parent=23 // pred_check_branch
        %211 = sbr.rel (%p209) target = $region32
      $region31: #{gpt_forward.8} parent=23 // pred_region
        %s212 = sadd.s32 %s18, %s19
        %p213 = scmp.lt.s32.totalorder %s212, 1
        %s214 = scalar_select %p213, %s212, 1
        %s215 = smul.addr %s214, 4
        %s216 = scalar_lea.vmem %s1, %s215
        %s217 = sadd.s32 %s18, %s19
      $region32: #{gpt_forward.8} parent=23 // pred_fallthru
        _
      // Predicated region
      $region33: #{gpt_forward.8} parent=23 // pred_check
        %p218 = pneg %p99
      $region34: #{gpt_forward.8} parent=23 // pred_check_branch
        %220 = sbr.rel (%p218) target = $region36
      $region35: #{gpt_forward.8} parent=23 // pred_region
        %p221 = scmp.lt.s32.totalorder %s18, 1
        %s222 = scalar_select %p221, %s18, 1
        %s223 = smul.addr %s222, 4
        %s224 = scalar_lea.vmem %s2, %s223
      $region36: #{gpt_forward.8} parent=23 // pred_fallthru
        _
    $region24: #{gpt_forward.8} parent=5 // pred_fallthru
      _
    %p225 = scmp.le.s32.totalorder 1, %s11
    %p226 = scmp.lt.s32.totalorder %s11, 3
    %p227 = pnand %p225, %p226
    %p228 = pneg %p227
    // Predicated region
    $region37: #{gpt_forward.8} parent=5 // pred_check
      _
    $region38: #{gpt_forward.8} parent=5 // pred_check_branch
      %230 = sbr.rel (%p227) target = $region40
    $region39: #{gpt_forward.8} parent=5 // pred_region
      %s231 = ssub.s32 %s11, 1
      %s232 = sadd.s32 %s20, %s21
      %p233 = scmp.lt.s32.totalorder %s232, 1
      %s234 = scalar_select %p233, %s232, 1
      %s235 = smul.addr %s234, 4
      %s236 = scalar_lea.vmem %s0, %s235
      %p237 = pneg %p51
      %p238 = pneg %p48
      %s239 = sadd.s32 %s20, %s21
      %p240 = scmp.lt.s32.totalorder %s239, 1
      %s241 = scalar_select %p240, %s239, 1
      %s242 = smul.addr %s241, 4
      %s243 = scalar_lea.vmem %s1, %s242
      %p244 = pneg %p79
      %p245 = pneg %p76
      %p246 = scmp.lt.s32.totalorder %s20, 1
      %s247 = scalar_select %p246, %s20, 1
      %s248 = smul.addr %s247, 4
      %s249 = scalar_lea.vmem %s2, %s248
      %p250 = pneg %p105
      %p251 = pneg %p102
      %p252 = pneg %p126
      %p253 = pneg %p123
      %p254 = pneg %p147
      %p255 = pneg %p144
      %p256 = pneg %p175
      %p257 = pneg %p172
      %s258 = sadd.s32 %s20, %s21
      %p259 = scmp.lt.s32.totalorder %s258, 1
      %s260 = scalar_select %p259, %s258, 1
      %s261 = smul.addr %s260, 4
      %s262 = scalar_lea.vmem %s5, %s261
      %s263 = sadd.s32 %s20, %s21
      %p264 = scmp.lt.s32.totalorder %s263, 1
      %s265 = scalar_select %p264, %s263, 1
      %s266 = smul.addr %s265, 4
      %s267 = scalar_lea.vmem %s0, %s266
      %s268 = sadd.s32 %s20, %s21
      %s269 = sadd.s32 %s20, %s21
      %p270 = scmp.lt.s32.totalorder %s269, 1
      %s271 = scalar_select %p270, %s269, 1
      %s272 = smul.addr %s271, 4
      %s273 = scalar_lea.vmem %s1, %s272
      %s274 = sadd.s32 %s20, %s21
      %p275 = scmp.lt.s32.totalorder %s20, 1
      %s276 = scalar_select %p275, %s20, 1
      %s277 = smul.addr %s276, 4
      %s278 = scalar_lea.vmem %s2, %s277
      %s279 = sadd.s32 %s20, %s21
      %p280 = scmp.lt.s32.totalorder %s279, 1
      %s281 = scalar_select %p280, %s279, 1
      %s282 = smul.addr %s281, 4
      %s283 = scalar_lea.vmem %s5, %s282
      %s284 = sadd.s32 %s20, %s21
      %v286 = vld [vmem:[%s267] sm:$0xf]
      %v287 = vunpack.c.l.bf16 %v286
      %v288 = vld [vmem:[%s273] sm:$0xf]
      %v289 = vld [vmem:[%s278] sm:$0xf]
      %s290 = smul.u32 %s21, 8
      %v291 = vlaneseq
      %v292 = vshrl.u32 %v291, 7
      %v293 = vstv %s290
      %v294 = vadd.s32 %v293, %v292
      %v295 = vlaneseq
      %v296 = vand.u32 %v295, 127
      %vm297 = vcmp.gt.s32.totalorder %v296, %v294
      %v299 = vunpack.c.l.b16 %v289
      %v300 = vpack.c.b16 %v299, %v299
      %301 = vrot.lane.b32.xlu0 %v300, 96
      %v302 = vpop.permute.xlu0 %301
      %vm303 = vcmask 64512
      %v305 = vsel %vm303, %v288, 0
      %v308 = vsel %vm303, %v302, 0
      %310 = vmatpush.bf16.xpose.msra.mxu0 0
      %311 = vmatpush.bf16.xpose.msra.mxu0 0
      %312 = vmatpush.bf16.xpose.msra.mxu0 0
      %313 = vmatpush.bf16.xpose.msra.mxu0 0
      %314 = vmatpush.bf16.xpose.msra.mxu0 0
      %315 = vmatpush.bf16.xpose.msra.mxu0 0
      %316 = vmatpush.bf16.xpose.msra.mxu0 0
      %317 = vmatpush.bf16.xpose.msra.mxu0 %v308
      %318 = vmatmul.bf16.gmra.mxu0 %v305
      %v319 = vpop.f32.mrf.mxu0
      %v320 = vadd.f32 0.0, %v319
      %v321 = vpop.f32.mrf.mxu0
      %322 = vdwg.mxu0
      %v323 = vsel %vm297, -1e+30, %v320
      %v324 = vsel %vm303, %v323, -inf
      %325 = vmax.xlane.f32.xlu0 %v324
      %v326 = vpop.xlane.xlu0 %325
      %v327 = vsub.f32 %v323, %v326
      %v328 = vmul.f32 %v327, 1.442695
      %v329 = vpow.pop %v328
      %v330 = vsel %vm303, %v329, 0.0
      %331 = vadd.xlane.f32.xlu0 %v330
      %v332 = vpop.xlane.xlu0 %331
      %v333 = vrcp.pop %v332
      %v334 = vmul.f32 %v332, %v333
      %v335 = vsub.f32 1.0, %v334
      %v336 = vmul.f32 %v333, %v335
      %v337 = vadd.f32 %v333, %v336
      %vm338 = vweird.f32 %v332
      %vm339 = vweird.f32 %v333
      %vm340 = vmor %vm338, %vm339
      %v341 = vsel %vm340, %v333, %v337
      %v342 = vand.u32 2147483647, %v332
      %vm343 = vcmp.eq.f32.partialorder %v342, 8.507059e+37
      %v344 = vand.u32 %v332, 2147483648
      %v345 = vor.u32 1.1754944e-38, %v344
      %v346 = vsel %vm343, %v345, %v341
      %v347 = vmul.f32 %v329, %v346
      %v348 = vpack.c.bf16 %v347, %v347
      %349 = vrot.lane.b32.xlu0 %v300, 64
      %v350 = vpop.permute.xlu0 %349
      %v352 = vsel %vm303, %v348, 0
      %vm354 = vcmask 1043456
      %v356 = vsel %vm354, %v350, 0
      %358 = vmatpush.bf16.msra.mxu0 0
      %359 = vmatpush.bf16.msra.mxu0 0
      %360 = vmatpush.bf16.msra.mxu0 0
      %361 = vmatpush.bf16.msra.mxu0 0
      %362 = vmatpush.bf16.msra.mxu0 0
      %363 = vmatpush.bf16.msra.mxu0 0
      %364 = vmatpush.bf16.msra.mxu0 0
      %365 = vmatpush.bf16.msra.mxu0 %v356
      %366 = vmatmul.bf16.gmra.mxu0 %v352
      %v367 = vpop.f32.mrf.mxu0
      %v368 = vadd.f32 0.0, %v367
      %v369 = vpop.f32.mrf.mxu0
      %370 = vdwg.mxu0
      %v371 = vld [vmem:[%s3] sm:$0xf]
      %v372 = vpack.c.bf16 %v368, %v368
      %v374 = vunpack.c.l.b16 %v288
      %v375 = vpack.c.b16 %v374, %v374
      %376 = vrot.lane.b32.xlu0 %v375, 120
      %v377 = vpop.permute.xlu0 %376
      %378 = vrot.lane.b32.xlu0 %v300, 88
      %v379 = vpop.permute.xlu0 %378
      %v381 = vsel %vm303, %v377, 0
      %v384 = vsel %vm303, %v379, 0
      %386 = vmatpush.bf16.xpose.msra.mxu0 0
      %387 = vmatpush.bf16.xpose.msra.mxu0 0
      %388 = vmatpush.bf16.xpose.msra.mxu0 0
      %389 = vmatpush.bf16.xpose.msra.mxu0 0
      %390 = vmatpush.bf16.xpose.msra.mxu0 0
      %391 = vmatpush.bf16.xpose.msra.mxu0 0
      %392 = vmatpush.bf16.xpose.msra.mxu0 0
      %393 = vmatpush.bf16.xpose.msra.mxu0 %v384
      %394 = vmatmul.bf16.gmra.mxu0 %v381
      %v395 = vpop.f32.mrf.mxu0
      %v396 = vadd.f32 0.0, %v395
      %v397 = vpop.f32.mrf.mxu0
      %398 = vdwg.mxu0
      %v399 = vsel %vm297, -1e+30, %v396
      %v400 = vsel %vm303, %v399, -inf
      %401 = vmax.xlane.f32.xlu0 %v400
      %v402 = vpop.xlane.xlu0 %401
      %v403 = vsub.f32 %v399, %v402
      %v404 = vmul.f32 %v403, 1.442695
      %v405 = vpow.pop %v404
      %v406 = vsel %vm303, %v405, 0.0
      %407 = vadd.xlane.f32.xlu0 %v406
      %v408 = vpop.xlane.xlu0 %407
      %v409 = vrcp.pop %v408
      %v410 = vmul.f32 %v408, %v409
      %v411 = vsub.f32 1.0, %v410
      %v412 = vmul.f32 %v409, %v411
      %v413 = vadd.f32 %v409, %v412
      %vm414 = vweird.f32 %v408
      %vm415 = vweird.f32 %v409
      %vm416 = vmor %vm414, %vm415
      %v417 = vsel %vm416, %v409, %v413
      %v418 = vand.u32 2147483647, %v408
      %vm419 = vcmp.eq.f32.partialorder %v418, 8.507059e+37
      %v420 = vand.u32 %v408, 2147483648
      %v421 = vor.u32 1.1754944e-38, %v420
      %v422 = vsel %vm419, %v421, %v417
      %v423 = vmul.f32 %v405, %v422
      %v424 = vpack.c.bf16 %v423, %v423
      %425 = vrot.lane.b32.xlu0 %v300, 56
      %v426 = vpop.permute.xlu0 %425
      %v428 = vsel %vm303, %v424, 0
      %v431 = vsel %vm354, %v426, 0
      %433 = vmatpush.bf16.msra.mxu0 0
      %434 = vmatpush.bf16.msra.mxu0 0
      %435 = vmatpush.bf16.msra.mxu0 0
      %436 = vmatpush.bf16.msra.mxu0 0
      %437 = vmatpush.bf16.msra.mxu0 0
      %438 = vmatpush.bf16.msra.mxu0 0
      %439 = vmatpush.bf16.msra.mxu0 0
      %440 = vmatpush.bf16.msra.mxu0 %v431
      %441 = vmatmul.bf16.gmra.mxu0 %v428
      %v442 = vpop.f32.mrf.mxu0
      %v443 = vadd.f32 0.0, %v442
      %v444 = vpop.f32.mrf.mxu0
      %445 = vdwg.mxu0
      %v446 = vld [vmem:[%s3 + $0x4] sm:$0xf]
      %v447 = vpack.c.bf16 %v443, %v443
      %v449 = vsel %vm303, %v447, 0
      %v452 = vsel %vm354, %v446, 0
      %454 = vmatpush.bf16.msra.mxu0 0
      %455 = vmatpush.bf16.msra.mxu0 0
      %456 = vmatpush.bf16.msra.mxu0 0
      %457 = vmatpush.bf16.msra.mxu0 0
      %458 = vmatpush.bf16.msra.mxu0 0
      %459 = vmatpush.bf16.msra.mxu0 0
      %460 = vmatpush.bf16.msra.mxu0 0
      %461 = vmatpush.bf16.msra.mxu0 %v452
      %462 = vmatmul.bf16.gmra.mxu0 %v449
      %v463 = vpop.f32.mrf.mxu0
      %v464 = vadd.f32 0.0, %v463
      %v465 = vpop.f32.mrf.mxu0
      %466 = vdwg.mxu0
      %v468 = vsel %vm303, %v372, 0
      %v471 = vsel %vm354, %v371, 0
      %473 = vmatpush.bf16.msra.mxu0 0
      %474 = vmatpush.bf16.msra.mxu0 0
      %475 = vmatpush.bf16.msra.mxu0 0
      %476 = vmatpush.bf16.msra.mxu0 0
      %477 = vmatpush.bf16.msra.mxu0 0
      %478 = vmatpush.bf16.msra.mxu0 0
      %479 = vmatpush.bf16.msra.mxu0 0
      %480 = vmatpush.bf16.msra.mxu0 %v471
      %481 = vmatmul.bf16.gmra.mxu0 %v468
      %v482 = vpop.f32.mrf.mxu0
      %v483 = vadd.f32 %v464, %v482
      %v484 = vpop.f32.mrf.mxu0
      %485 = vdwg.mxu0
      %486 = vrot.lane.b32.xlu0 %v375, 112
      %v487 = vpop.permute.xlu0 %486
      %488 = vrot.lane.b32.xlu0 %v300, 80
      %v489 = vpop.permute.xlu0 %488
      %v491 = vsel %vm303, %v487, 0
      %v494 = vsel %vm303, %v489, 0
      %496 = vmatpush.bf16.xpose.msra.mxu0 0
      %497 = vmatpush.bf16.xpose.msra.mxu0 0
      %498 = vmatpush.bf16.xpose.msra.mxu0 0
      %499 = vmatpush.bf16.xpose.msra.mxu0 0
      %500 = vmatpush.bf16.xpose.msra.mxu0 0
      %501 = vmatpush.bf16.xpose.msra.mxu0 0
      %502 = vmatpush.bf16.xpose.msra.mxu0 0
      %503 = vmatpush.bf16.xpose.msra.mxu0 %v494
      %504 = vmatmul.bf16.gmra.mxu0 %v491
      %v505 = vpop.f32.mrf.mxu0
      %v506 = vadd.f32 0.0, %v505
      %v507 = vpop.f32.mrf.mxu0
      %508 = vdwg.mxu0
      %v509 = vsel %vm297, -1e+30, %v506
      %v510 = vsel %vm303, %v509, -inf
      %511 = vmax.xlane.f32.xlu0 %v510
      %v512 = vpop.xlane.xlu0 %511
      %v513 = vsub.f32 %v509, %v512
      %v514 = vmul.f32 %v513, 1.442695
      %v515 = vpow.pop %v514
      %v516 = vsel %vm303, %v515, 0.0
      %517 = vadd.xlane.f32.xlu0 %v516
      %v518 = vpop.xlane.xlu0 %517
      %v519 = vrcp.pop %v518
      %v520 = vmul.f32 %v518, %v519
      %v521 = vsub.f32 1.0, %v520
      %v522 = vmul.f32 %v519, %v521
      %v523 = vadd.f32 %v519, %v522
      %vm524 = vweird.f32 %v518
      %vm525 = vweird.f32 %v519
      %vm526 = vmor %vm524, %vm525
      %v527 = vsel %vm526, %v519, %v523
      %v528 = vand.u32 2147483647, %v518
      %vm529 = vcmp.eq.f32.partialorder %v528, 8.507059e+37
      %v530 = vand.u32 %v518, 2147483648
      %v531 = vor.u32 1.1754944e-38, %v530
      %v532 = vsel %vm529, %v531, %v527
      %v533 = vmul.f32 %v515, %v532
      %v534 = vpack.c.bf16 %v533, %v533
      %535 = vrot.lane.b32.xlu0 %v300, 48
      %v536 = vpop.permute.xlu0 %535
      %v538 = vsel %vm303, %v534, 0
      %v541 = vsel %vm354, %v536, 0
      %543 = vmatpush.bf16.msra.mxu0 0
      %544 = vmatpush.bf16.msra.mxu0 0
      %545 = vmatpush.bf16.msra.mxu0 0
      %546 = vmatpush.bf16.msra.mxu0 0
      %547 = vmatpush.bf16.msra.mxu0 0
      %548 = vmatpush.bf16.msra.mxu0 0
      %549 = vmatpush.bf16.msra.mxu0 0
      %550 = vmatpush.bf16.msra.mxu0 %v541
      %551 = vmatmul.bf16.gmra.mxu0 %v538
      %v552 = vpop.f32.mrf.mxu0
      %v553 = vadd.f32 0.0, %v552
      %v554 = vpop.f32.mrf.mxu0
      %555 = vdwg.mxu0
      %v556 = vld [vmem:[%s3 + $0x8] sm:$0xf]
      %v557 = vpack.c.bf16 %v553, %v553
      %v559 = vsel %vm303, %v557, 0
      %v562 = vsel %vm354, %v556, 0
      %564 = vmatpush.bf16.msra.mxu0 0
      %565 = vmatpush.bf16.msra.mxu0 0
      %566 = vmatpush.bf16.msra.mxu0 0
      %567 = vmatpush.bf16.msra.mxu0 0
      %568 = vmatpush.bf16.msra.mxu0 0
      %569 = vmatpush.bf16.msra.mxu0 0
      %570 = vmatpush.bf16.msra.mxu0 0
      %571 = vmatpush.bf16.msra.mxu0 %v562
      %572 = vmatmul.bf16.gmra.mxu0 %v559
      %v573 = vpop.f32.mrf.mxu0
      %v574 = vadd.f32 0.0, %v573
      %v575 = vpop.f32.mrf.mxu0
      %576 = vdwg.mxu0
      %v577 = vadd.f32 %v483, %v574
      %578 = vrot.lane.b32.xlu0 %v375, 104
      %v579 = vpop.permute.xlu0 %578
      %580 = vrot.lane.b32.xlu0 %v300, 72
      %v581 = vpop.permute.xlu0 %580
      %v583 = vsel %vm303, %v579, 0
      %v586 = vsel %vm303, %v581, 0
      %588 = vmatpush.bf16.xpose.msra.mxu0 0
      %589 = vmatpush.bf16.xpose.msra.mxu0 0
      %590 = vmatpush.bf16.xpose.msra.mxu0 0
      %591 = vmatpush.bf16.xpose.msra.mxu0 0
      %592 = vmatpush.bf16.xpose.msra.mxu0 0
      %593 = vmatpush.bf16.xpose.msra.mxu0 0
      %594 = vmatpush.bf16.xpose.msra.mxu0 0
      %595 = vmatpush.bf16.xpose.msra.mxu0 %v586
      %596 = vmatmul.bf16.gmra.mxu0 %v583
      %v597 = vpop.f32.mrf.mxu0
      %v598 = vadd.f32 0.0, %v597
      %v599 = vpop.f32.mrf.mxu0
      %600 = vdwg.mxu0
      %v601 = vsel %vm297, -1e+30, %v598
      %v602 = vsel %vm303, %v601, -inf
      %603 = vmax.xlane.f32.xlu0 %v602
      %v604 = vpop.xlane.xlu0 %603
      %v605 = vsub.f32 %v601, %v604
      %v606 = vmul.f32 %v605, 1.442695
      %v607 = vpow.pop %v606
      %v608 = vsel %vm303, %v607, 0.0
      %609 = vadd.xlane.f32.xlu0 %v608
      %v610 = vpop.xlane.xlu0 %609
      %v611 = vrcp.pop %v610
      %v612 = vmul.f32 %v610, %v611
      %v613 = vsub.f32 1.0, %v612
      %v614 = vmul.f32 %v611, %v613
      %v615 = vadd.f32 %v611, %v614
      %vm616 = vweird.f32 %v610
      %vm617 = vweird.f32 %v611
      %vm618 = vmor %vm616, %vm617
      %v619 = vsel %vm618, %v611, %v615
      %v620 = vand.u32 2147483647, %v610
      %vm621 = vcmp.eq.f32.partialorder %v620, 8.507059e+37
      %v622 = vand.u32 %v610, 2147483648
      %v623 = vor.u32 1.1754944e-38, %v622
      %v624 = vsel %vm621, %v623, %v619
      %v625 = vmul.f32 %v607, %v624
      %v626 = vpack.c.bf16 %v625, %v625
      %627 = vrot.lane.b32.xlu0 %v300, 40
      %v628 = vpop.permute.xlu0 %627
      %v630 = vsel %vm303, %v626, 0
      %v633 = vsel %vm354, %v628, 0
      %635 = vmatpush.bf16.msra.mxu0 0
      %636 = vmatpush.bf16.msra.mxu0 0
      %637 = vmatpush.bf16.msra.mxu0 0
      %638 = vmatpush.bf16.msra.mxu0 0
      %639 = vmatpush.bf16.msra.mxu0 0
      %640 = vmatpush.bf16.msra.mxu0 0
      %641 = vmatpush.bf16.msra.mxu0 0
      %642 = vmatpush.bf16.msra.mxu0 %v633
      %643 = vmatmul.bf16.gmra.mxu0 %v630
      %v644 = vpop.f32.mrf.mxu0
      %v645 = vadd.f32 0.0, %v644
      %v646 = vpop.f32.mrf.mxu0
      %647 = vdwg.mxu0
      %v648 = vld [vmem:[%s3 + $0xc] sm:$0xf]
      %v649 = vpack.c.bf16 %v645, %v645
      %v651 = vsel %vm303, %v649, 0
      %v654 = vsel %vm354, %v648, 0
      %656 = vmatpush.bf16.msra.mxu0 0
      %657 = vmatpush.bf16.msra.mxu0 0
      %658 = vmatpush.bf16.msra.mxu0 0
      %659 = vmatpush.bf16.msra.mxu0 0
      %660 = vmatpush.bf16.msra.mxu0 0
      %661 = vmatpush.bf16.msra.mxu0 0
      %662 = vmatpush.bf16.msra.mxu0 0
      %663 = vmatpush.bf16.msra.mxu0 %v654
      %664 = vmatmul.bf16.gmra.mxu0 %v651
      %v665 = vpop.f32.mrf.mxu0
      %v666 = vadd.f32 0.0, %v665
      %v667 = vpop.f32.mrf.mxu0
      %668 = vdwg.mxu0
      %v669 = vadd.f32 %v577, %v666
      %v670 = vadd.f32 %v287, %v669
      %v671 = vld [vmem:[%s4] sm:$0x1]
      %v672 = vunpack.c.l.bf16 %v671
      %v673 = vperm.slane %v672, 0
      %v674 = vadd.f32 %v670, %v673
      %v675 = vpack.c.bf16 %v674, %v674
      %vm676 = vcmask 257024
      %677 = vst.msk [vmem:[%s283] sm:$0xf] %vm676, %v675
      %s678 = sadd.s32 %s20, %s21
      %p679 = scmp.lt.s32.totalorder %s678, 1
      %s680 = scalar_select %p679, %s678, 1
      %s681 = smul.addr %s680, 4
      %s682 = scalar_lea.vmem %s5, %s681
      // Predicated region
      $region41: #{gpt_forward.8} parent=39 // pred_check
        %p683 = pneg %p172
      $region42: #{gpt_forward.8} parent=39 // pred_check_branch
        %685 = sbr.rel (%p683) target = $region44
      $region43: #{gpt_forward.8} parent=39 // pred_region
        %s686 = sadd.s32 %s20, %s21
      $region44: #{gpt_forward.8} parent=39 // pred_fallthru
        _
    $region40: #{gpt_forward.8} parent=5 // pred_fallthru
      _
    %p687 = scmp.le.s32.totalorder 2, %s11
    // Predicated region
    $region45: #{gpt_forward.8} parent=5 // pred_check
      %p688 = pneg %p687
    $region46: #{gpt_forward.8} parent=5 // pred_check_branch
      %690 = sbr.rel (%p688) target = $region48
    $region47: #{gpt_forward.8} parent=5 // pred_region
      %s691 = ssub.s32 %s11, 2
      // Predicated region
      $region49: #{gpt_forward.8} parent=47 // pred_check
        %p692 = pneg %p178
      $region50: #{gpt_forward.8} parent=47 // pred_check_branch
        %694 = sbr.rel (%p692) target = $region52
      $region51: #{gpt_forward.8} parent=47 // pred_region
        %s695 = sadd.s32 %s22, %s23
        %p696 = scmp.lt.s32.totalorder %s695, 1
        %s697 = scalar_select %p696, %s695, 1
        %s698 = smul.addr %s697, 4
        %s699 = scalar_lea.vmem %s5, %s698
      $region52: #{gpt_forward.8} parent=47 // pred_fallthru
        _
    $region48: #{gpt_forward.8} parent=5 // pred_fallthru
      _
  $region6: #{gpt_forward.8} parent=0 // loop_footer
    %s15 = sadd.s32 1, %s11
  $region7: #{gpt_forward.8} parent=0 // loop_footer_branch
    %10 = sbr.rel target = $region3
  $region8: #{gpt_forward.8} parent=0 // loop_exit
    _

// kernel: gpt_forward.9
$region0: #{gpt_forward.9}
  #allocation0 [shape = 'u32[]', space=smem, size = 0x4, offset = 0x4, fixed_abs, tag = 'smem constant byte address 0x4 - core index']
  #allocation1 [shape = 'u32[72,128]{1,0:T(1,128)}', space=vmem, size = 0x9000, scoped, tag = 'internal scratch']
  %s0 = inlined_call_operand.vmem [shape: bf16[16,32], index: 0, kind: input, shape index: {}]
  %s1 = inlined_call_operand.vmem [shape: f32[1,32], index: 1, kind: input, shape index: {}]
  %s2 = inlined_call_operand.vmem [shape: f32[1,32], index: 2, kind: input, shape index: {}]
  %s3 = inlined_call_operand.vmem [shape: bf16[32,128], index: 3, kind: input, shape index: {}]
  %s4 = inlined_call_operand.vmem [shape: bf16[1,128], index: 4, kind: input, shape index: {}]
  %s5 = inlined_call_operand.vmem [shape: bf16[128,32], index: 5, kind: input, shape index: {}]
  %s6 = inlined_call_operand.vmem [shape: bf16[1,32], index: 6, kind: input, shape index: {}]
  %s7 = inlined_call_operand.vmem [shape: bf16[16,32], index: 7, kind: output, shape index: {}]
  %s8 = sld [smem:[#allocation0]]
  $region38: #{gpt_forward.9} parent=0
    _
  %s10 = ssub.s32 1, %s8
  %s11 = scalar_select 0, %s10, %s8
  // Predicated region
  $region2: #{gpt_forward.9} parent=0 // pred_check
    _
  $region3: #{gpt_forward.9} parent=0 // pred_check_branch
    %13 = sbr.rel (0) target = $region5
  $region4: #{gpt_forward.9} parent=0 // pred_region
    _
  $region5: #{gpt_forward.9} parent=0 // pred_fallthru
    _
  // Predicated region
  $region6: #{gpt_forward.9} parent=0 // pred_check
    _
  $region7: #{gpt_forward.9} parent=0 // pred_check_branch
    %15 = sbr.rel (0) target = $region9
  $region8: #{gpt_forward.9} parent=0 // pred_region
    _
  $region9: #{gpt_forward.9} parent=0 // pred_fallthru
    _
  // Predicated region
  $region10: #{gpt_forward.9} parent=0 // pred_check
    _
  $region11: #{gpt_forward.9} parent=0 // pred_check_branch
    %17 = sbr.rel (0) target = $region13
  $region12: #{gpt_forward.9} parent=0 // pred_region
    _
  $region13: #{gpt_forward.9} parent=0 // pred_fallthru
    _
  // Predicated region
  $region14: #{gpt_forward.9} parent=0 // pred_check
    _
  $region15: #{gpt_forward.9} parent=0 // pred_check_branch
    %19 = sbr.rel (0) target = $region17
  $region16: #{gpt_forward.9} parent=0 // pred_region
    _
  $region17: #{gpt_forward.9} parent=0 // pred_fallthru
    _
  // Predicated region
  $region18: #{gpt_forward.9} parent=0 // pred_check
    _
  $region19: #{gpt_forward.9} parent=0 // pred_check_branch
    %21 = sbr.rel (0) target = $region21
  $region20: #{gpt_forward.9} parent=0 // pred_region
    _
  $region21: #{gpt_forward.9} parent=0 // pred_fallthru
    _
  // Predicated region
  $region22: #{gpt_forward.9} parent=0 // pred_check
    _
  $region23: #{gpt_forward.9} parent=0 // pred_check_branch
    %23 = sbr.rel (0) target = $region25
  $region24: #{gpt_forward.9} parent=0 // pred_region
    _
  $region25: #{gpt_forward.9} parent=0 // pred_fallthru
    _
  // Predicated region
  $region26: #{gpt_forward.9} parent=0 // pred_check
    _
  $region27: #{gpt_forward.9} parent=0 // pred_check_branch
    %25 = sbr.rel (0) target = $region29
  $region28: #{gpt_forward.9} parent=0 // pred_region
    _
  $region29: #{gpt_forward.9} parent=0 // pred_fallthru
    _
  %v27 = vld [vmem:[%s0] sm:$0xf]
  %v28 = vld [vmem:[%s0 + $0x4] sm:$0xf]
  %v29 = vunpack.c.l.bf16 %v27
  %v30 = vunpack.c.l.bf16 %v28
  %v31 = vld [vmem:[%s1] sm:$0x1]
  %v32 = vld [vmem:[%s2] sm:$0x1]
  %vm33 = vcmask 261120
  %v34 = vsel %vm33, %v29, 0.0
  %35 = vadd.xlane.f32.xlu0 %v34
  %v36 = vpop.xlane.xlu0 %35
  %v37 = vsel %vm33, %v30, 0.0
  %38 = vadd.xlane.f32.xlu0 %v37
  %v39 = vpop.xlane.xlu0 %38
  %v40 = vrcp.pop 32.0
  %v41 = vmul.f32 32.0, %v40
  %v42 = vsub.f32 1.0, %v41
  %v43 = vmul.f32 %v40, %v42
  %v44 = vadd.f32 %v40, %v43
  %vm45 = vweird.f32 %v40
  %v46 = vsel %vm45, %v40, %v44
  %v47 = vmul.f32 %v36, %v46
  %v48 = vmul.f32 %v39, %v46
  %v49 = vsub.f32 %v29, %v47
  %v50 = vsub.f32 %v30, %v48
  %v51 = vmul.f32 %v49, %v49
  %v52 = vmul.f32 %v50, %v50
  %v53 = vsel %vm33, %v51, 0.0
  %54 = vadd.xlane.f32.xlu0 %v53
  %v55 = vpop.xlane.xlu0 %54
  %v56 = vsel %vm33, %v52, 0.0
  %57 = vadd.xlane.f32.xlu0 %v56
  %v58 = vpop.xlane.xlu0 %57
  %v59 = vmul.f32 %v55, %v46
  %v60 = vmul.f32 %v58, %v46
  %v61 = vadd.f32 %v59, 1e-05
  %v62 = vadd.f32 %v60, 1e-05
  %v63 = vrsqrt.pop %v61
  %v64 = vmul.f32 %v63, %v61
  %v65 = vmul.f32 %v64, %v63
  %v66 = vmul.f32 0.5, %v65
  %v67 = vsub.f32 1.5, %v66
  %v68 = vmul.f32 %v63, %v67
  %vm69 = vweird.f32 %v61
  %vm70 = vweird.f32 %v63
  %vm71 = vmor %vm69, %vm70
  %v72 = vsel %vm71, %v63, %v68
  %v73 = vrsqrt.pop %v62
  %v74 = vmul.f32 %v73, %v62
  %v75 = vmul.f32 %v74, %v73
  %v76 = vmul.f32 0.5, %v75
  %v77 = vsub.f32 1.5, %v76
  %v78 = vmul.f32 %v73, %v77
  %vm79 = vweird.f32 %v62
  %vm80 = vweird.f32 %v73
  %vm81 = vmor %vm79, %vm80
  %v82 = vsel %vm81, %v73, %v78
  %v83 = vmul.f32 %v49, %v72
  %v84 = vmul.f32 %v50, %v82
  %v86 = vperm.slane %v31, 0
  %v88 = vmul.f32 %v86, %v83
  %v89 = vmul.f32 %v86, %v84
  %v91 = vperm.slane %v32, 0
  %v93 = vadd.f32 %v88, %v91
  %v94 = vadd.f32 %v89, %v91
  %v95 = vld [vmem:[%s3] sm:$0xf]
  %v96 = vld [vmem:[%s3 + $0x4] sm:$0xf]
  %v97 = vld [vmem:[%s3 + $0x8] sm:$0xf]
  %v98 = vld [vmem:[%s3 + $0xc] sm:$0xf]
  %v99 = vld [vmem:[%s4] sm:$0x1]
  %v100 = vpack.c.bf16 %v94, %v93
  %v101 = vunpack.c.l.bf16 %v99
  %v102 = vperm.slane %v101, 0
  %v107 = vunpack.c.l.b16 %v95
  %v108 = vunpack.c.l.b16 %v96
  %v109 = vunpack.c.l.b16 %v97
  %v110 = vunpack.c.l.b16 %v98
  %v111 = vpack.c.b16 %v108, %v107
  %v112 = vpack.c.b16 %v110, %v109
  %v116 = vsel %vm33, %v100, 0
  %118 = vmatpush.bf16.msra.mxu0 0
  %119 = vmatpush.bf16.msra.mxu0 0
  %120 = vmatpush.bf16.msra.mxu0 0
  %121 = vmatpush.bf16.msra.mxu0 0
  %122 = vmatpush.bf16.msra.mxu0 0
  %123 = vmatpush.bf16.msra.mxu0 0
  %124 = vmatpush.bf16.msra.mxu0 %v112
  %125 = vmatpush.bf16.msra.mxu0 %v111
  %126 = vmatmul.bf16.gmra.mxu0 %v116
  %v127 = vpop.f32.mrf.mxu0
  %v128 = vadd.f32 %v102, %v127
  %v129 = vpop.f32.mrf.mxu0
  %v130 = vadd.f32 %v102, %v129
  %131 = vdwg.mxu0
  %v132 = vmul.f32 %v128, 0.5
  %v133 = vmul.f32 %v130, 0.5
  %v134 = vmul.f32 %v128, 0.044715
  %v135 = vmul.f32 %v130, 0.044715
  %v136 = vmul.f32 %v134, %v128
  %v137 = vmul.f32 %v135, %v130
  %v138 = vmul.f32 %v136, %v128
  %v139 = vmul.f32 %v137, %v130
  %v140 = vadd.f32 %v128, %v138
  %v141 = vadd.f32 %v130, %v139
  %v142 = vmul.f32 %v140, 0.7978846
  %v143 = vmul.f32 %v141, 0.7978846
  %v144 = vtanh.pop %v142
  %v145 = vtanh.pop %v143
  %v146 = vadd.f32 %v144, 1.0
  %v147 = vadd.f32 %v145, 1.0
  %v148 = vmul.f32 %v132, %v146
  %v149 = vmul.f32 %v133, %v147
  %v150 = vld [vmem:[%s5] sm:$0xf]
  %v151 = vld [vmem:[%s5 + $0x4] sm:$0xf]
  %v152 = vld [vmem:[%s5 + $0x8] sm:$0xf]
  %v153 = vld [vmem:[%s5 + $0xc] sm:$0xf]
  %v154 = vld [vmem:[%s5 + $0x10] sm:$0xf]
  %v155 = vld [vmem:[%s5 + $0x14] sm:$0xf]
  %v156 = vld [vmem:[%s5 + $0x18] sm:$0xf]
  %v157 = vld [vmem:[%s5 + $0x1c] sm:$0xf]
  %v158 = vld [vmem:[%s5 + $0x20] sm:$0xf]
  %v159 = vld [vmem:[%s5 + $0x24] sm:$0xf]
  %v160 = vld [vmem:[%s5 + $0x28] sm:$0xf]
  %v161 = vld [vmem:[%s5 + $0x2c] sm:$0xf]
  %v162 = vld [vmem:[%s5 + $0x30] sm:$0xf]
  %v163 = vld [vmem:[%s5 + $0x34] sm:$0xf]
  %v164 = vld [vmem:[%s5 + $0x38] sm:$0xf]
  %v165 = vld [vmem:[%s5 + $0x3c] sm:$0xf]
  %v166 = vld [vmem:[%s6] sm:$0x1]
  %v167 = vpack.c.bf16 %v149, %v148
  %v168 = vunpack.c.l.bf16 %v166
  %v169 = vperm.slane %v168, 0
  %v186 = vunpack.c.l.b16 %v150
  %v187 = vunpack.c.l.b16 %v151
  %v188 = vunpack.c.l.b16 %v152
  %v189 = vunpack.c.l.b16 %v153
  %v190 = vunpack.c.l.b16 %v154
  %v191 = vunpack.c.l.b16 %v155
  %v192 = vunpack.c.l.b16 %v156
  %v193 = vunpack.c.l.b16 %v157
  %v194 = vunpack.c.l.b16 %v158
  %v195 = vunpack.c.l.b16 %v159
  %v196 = vunpack.c.l.b16 %v160
  %v197 = vunpack.c.l.b16 %v161
  %v198 = vunpack.c.l.b16 %v162
  %v199 = vunpack.c.l.b16 %v163
  %v200 = vunpack.c.l.b16 %v164
  %v201 = vunpack.c.l.b16 %v165
  %v202 = vpack.c.b16 %v187, %v186
  %v203 = vpack.c.b16 %v189, %v188
  %v204 = vpack.c.b16 %v191, %v190
  %v205 = vpack.c.b16 %v193, %v192
  %v206 = vpack.c.b16 %v195, %v194
  %v207 = vpack.c.b16 %v197, %v196
  %v208 = vpack.c.b16 %v199, %v198
  %v209 = vpack.c.b16 %v201, %v200
  %218 = vmatpush.bf16.msra.mxu0 %v209
  %219 = vmatpush.bf16.msra.mxu0 %v208
  %220 = vmatpush.bf16.msra.mxu0 %v207
  %221 = vmatpush.bf16.msra.mxu0 %v206
  %222 = vmatpush.bf16.msra.mxu0 %v205
  %223 = vmatpush.bf16.msra.mxu0 %v204
  %224 = vmatpush.bf16.msra.mxu0 %v203
  %225 = vmatpush.bf16.msra.mxu0 %v202
  %226 = vmatmul.bf16.gmra.mxu0 %v167
  %v227 = vpop.f32.mrf.mxu0
  %v228 = vadd.f32 %v169, %v227
  %v229 = vpop.f32.mrf.mxu0
  %v230 = vadd.f32 %v169, %v229
  %231 = vdwg.mxu0
  %v232 = vadd.f32 %v29, %v228
  %v233 = vadd.f32 %v30, %v230
  %v234 = vpack.c.bf16 %v232, %v232
  %v235 = vpack.c.bf16 %v233, %v233
  %vm236 = vcmask 257024
  %237 = vst.msk [vmem:[%s7] sm:$0xf] %vm236, %v234
  %238 = vst.msk [vmem:[%s7 + $0x4] sm:$0xf] %vm236, %v235
  // Predicated region
  $region30: #{gpt_forward.9} parent=0 // pred_check
    _
  $region31: #{gpt_forward.9} parent=0 // pred_check_branch
    %240 = sbr.rel (0) target = $region33
  $region32: #{gpt_forward.9} parent=0 // pred_region
    _
  $region33: #{gpt_forward.9} parent=0 // pred_fallthru
    _
  // Predicated region
  $region34: #{gpt_forward.9} parent=0 // pred_check
    _
  $region35: #{gpt_forward.9} parent=0 // pred_check_branch
    %242 = sbr.rel (0) target = $region37
  $region36: #{gpt_forward.9} parent=0 // pred_region
    _
  $region37: #{gpt_forward.9} parent=0 // pred_fallthru
    _

</llo_original>
